<compile_context>
chip_gen: v7x
topology: tpu7x:2x2x1
jax: 0.10.0
libtpu: 0.0.40
codegen_flags: <defaults>
</compile_context>

<pallas_src>
import jax
import jax.numpy as jnp
from jax.experimental import pallas as pl
from jax.experimental.pallas import tpu as pltpu


# ----------------------------------------------------------------------------
# Fused kernel: conv1+relu+pool -> conv2+relu+pool -> fc1 -> fc2 -> fc3
# ----------------------------------------------------------------------------
def _lenet_kernel(x_ref, w1_ref, b1_ref, w2_ref, b2_ref,
                  w1p_ref, b1p_ref, w2p_ref, b2p_ref, w3p_ref, b3p_ref,
                  o_ref):
    f32, bf16 = jnp.float32, jnp.bfloat16
    bt = x_ref.shape[0]                      # batch tile (sublane dim)

    w1 = w1_ref[...]                         # (140, 144) bf16, banded conv1
    w2 = w2_ref[...]                         # (360, 128) bf16, banded conv2
    b1 = b1_ref[...]                         # (1, 72)  f32
    b2 = b2_ref[...]                         # (1, 64)  f32

    # ---- conv1 + relu + 2x2 maxpool --------------------------------------
    # For pooled row s the two conv rows (2s, 2s+1) are stacked on M; the 5
    # row taps are a contiguous 140-lane window of the flattened image (K);
    # the two W-parities are fused on N (144 = 2 * 12 * 6).
    p1 = []
    for s in range(12):
        r0, r1 = 2 * s, 2 * s + 1
        lhs = jnp.concatenate([x_ref[:, r0 * 28:r0 * 28 + 140],
                               x_ref[:, r1 * 28:r1 * 28 + 140]], axis=0)
        y = jnp.dot(lhs.astype(bf16), w1, preferred_element_type=f32)  # (2bt,144)
        y = jnp.maximum(y[:, :72], y[:, 72:])        # pool over W (parity halves)
        y = jnp.maximum(y[:bt], y[bt:])              # pool over H (row pair)
        p1.append(jnp.maximum(y + b1, 0.0))          # bias + relu   (bt, 72)

    # ---- conv2 + relu + 2x2 maxpool --------------------------------------
    # Window = 5 pooled rows concatenated on lanes (K=360); N = 2*4*16 = 128.
    p2 = []
    for u in range(4):
        t0, t1 = 2 * u, 2 * u + 1
        win0 = jnp.concatenate([p1[t0 + i] for i in range(5)], axis=1)  # (bt,360)
        win1 = jnp.concatenate([p1[t1 + i] for i in range(5)], axis=1)  # (bt,360)
        lhs = jnp.concatenate([win0, win1], axis=0).astype(bf16)        # (2bt,360)
        y = jnp.dot(lhs, w2, preferred_element_type=f32)                # (2bt,128)
        y = jnp.maximum(y[:, :64], y[:, 64:])        # pool over W
        y = jnp.maximum(y[:bt], y[bt:])              # pool over H
        p2.append(jnp.maximum(y + b2, 0.0))          # (bt, 64)

    # ---- fc1 -> fc2 -> fc3 -------------------------------------------------
    # PyTorch (C,H,W) flatten order is folded into the w1p row permutation;
    # fc outputs are zero-padded to 128 lanes (lane-dense stores).
    feat = jnp.concatenate(p2, axis=1).astype(bf16)                     # (bt, 256)
    z1 = jnp.dot(feat, w1p_ref[...], preferred_element_type=f32) + b1p_ref[...]
    z1 = jnp.maximum(z1, 0.0).astype(bf16)
    z2 = jnp.dot(z1, w2p_ref[...], preferred_element_type=f32) + b2p_ref[...]
    z2 = jnp.maximum(z2, 0.0).astype(bf16)
    z3 = jnp.dot(z2, w3p_ref[...], preferred_element_type=f32) + b3p_ref[...]
    o_ref[...] = z3.astype(o_ref.dtype)                                 # (bt, 128)


# ----------------------------------------------------------------------------
# Parameter init (PyTorch-style distribution) and one-time packing
# ----------------------------------------------------------------------------
def init_params(key):
    ks = jax.random.split(key, 10)

    def u(k, shape, fan_in):
        bound = 1.0 / jnp.sqrt(jnp.float32(fan_in))
        return jax.random.uniform(k, shape, jnp.float32, -bound, bound)

    return {
        # conv weights stored as (KH, KW, Cin, Cout)
        "conv1_w": u(ks[0], (5, 5, 1, 6), 5 * 5 * 1),
        "conv1_b": u(ks[1], (6,), 5 * 5 * 1),
        "conv2_w": u(ks[2], (5, 5, 6, 16), 5 * 5 * 6),
        "conv2_b": u(ks[3], (16,), 5 * 5 * 6),
        # fc weights stored as (in, out) == PyTorch weight.T
        "fc1_w": u(ks[4], (16 * 4 * 4, 120), 16 * 4 * 4),
        "fc1_b": u(ks[5], (120,), 16 * 4 * 4),
        "fc2_w": u(ks[6], (120, 84), 120),
        "fc2_b": u(ks[7], (84,), 120),
        "fc3_w": u(ks[8], (84, 10), 84),
        "fc3_b": u(ks[9], (10,), 84),
    }


def pack_params(params):
    """Banded conv weights (taps fused on K, parities fused on N), bf16 matmul
    operands, fc1 flatten-order permutation, fc outputs padded to 128 lanes."""
    f32, bf16 = jnp.float32, jnp.bfloat16

    # conv1: K = 5 taps * 28 cols = 140 ; N = 2 parities * (12 pooled cols * 6 ch).
    w1 = params["conv1_w"]                                   # (5, 5, 1, 6)
    par = []
    for p in range(2):
        j = jnp.arange(28)[:, None] - 2 * jnp.arange(12)[None, :] - p   # (28, 12)
        valid = (j >= 0) & (j < 5)
        taps = []
        for i in range(5):
            g = w1[i, jnp.clip(j, 0, 4), 0, :]                           # (28, 12, 6)
            g = jnp.where(valid[..., None], g, 0.0)
            taps.append(g.reshape(28, 72))                               # col = wo2*6 + c
        par.append(jnp.concatenate(taps, axis=0))                        # (140, 72)
    w1b = jnp.concatenate(par, axis=1).astype(bf16)                      # (140, 144)
    b1 = jnp.tile(params["conv1_b"], 12).reshape(1, 72).astype(f32)

    # conv2: K = 5 taps * (12 cols * 6 ch) = 360 ; N = 2 * (4 pooled cols * 16 ch).
    w2 = params["conv2_w"]                                   # (5, 5, 6, 16)
    par = []
    for q in range(2):
        j = jnp.arange(12)[:, None] - 2 * jnp.arange(4)[None, :] - q     # (12, 4)
        valid = (j >= 0) & (j < 5)
        taps = []
        for i in range(5):
            g = w2[i, jnp.clip(j, 0, 4), :, :]                            # (12, 4, 6, 16)
            g = jnp.where(valid[..., None, None], g, 0.0)
            g = jnp.transpose(g, (0, 2, 1, 3)).reshape(72, 64)            # (w*ci, wo2*co)
            taps.append(g)
        par.append(jnp.concatenate(taps, axis=0))                         # (360, 64)
    w2b = jnp.concatenate(par, axis=1).astype(bf16)                       # (360, 128)
    b2 = jnp.tile(params["conv2_b"], 4).reshape(1, 64).astype(f32)

    # fc1: kernel feature order g = h*64 + w*16 + c ; PyTorch flatten f = c*16 + h*4 + w.
    g = jnp.arange(256)
    h, w, c = g // 64, (g // 16) % 4, g % 16
    f = c * 16 + h * 4 + w
    w1p = jnp.pad(params["fc1_w"][f, :], ((0, 0), (0, 8))).astype(bf16)   # (256, 128)
    b1p = jnp.pad(params["fc1_b"], (0, 8)).reshape(1, 128).astype(f32)
    w2p = jnp.pad(params["fc2_w"], ((0, 8), (0, 44))).astype(bf16)        # (128, 128)
    b2p = jnp.pad(params["fc2_b"], (0, 44)).reshape(1, 128).astype(f32)
    w3p = jnp.pad(params["fc3_w"], ((0, 44), (0, 118))).astype(bf16)      # (128, 128)
    b3p = jnp.pad(params["fc3_b"], (0, 118)).reshape(1, 128).astype(f32)

    return dict(w1=w1b, b1=b1, w2=w2b, b2=b2,
                w1p=w1p, b1p=b1p, w2p=w2p, b2p=b2p, w3p=w3p, b3p=b3p)


# ----------------------------------------------------------------------------
# Forward wrapper
# ----------------------------------------------------------------------------
def lenet_forward(packed, x_nchw, *, block_batch=256):
    """x_nchw: (N, 1, 28, 28) float32. Returns (N, 10) logits."""
    n = x_nchw.shape[0]
    x = x_nchw.reshape(n, 28 * 28)            # Cin == 1; free reshape, no HBM glue

    # Batch-tile selection: big tiles amortize grid overhead; for small N keep
    # >= 2 grid steps when possible so v7x's two TensorCores both get work.
    n8 = ((n + 7) // 8) * 8
    if n8 >= 2 * block_batch:
        bt = block_batch
    elif n8 >= 16:
        bt = ((n8 // 2) + 7) // 8 * 8
    else:
        bt = n8
    n_pad = ((n + bt - 1) // bt) * bt
    if n_pad != n:
        x = jnp.pad(x, ((0, n_pad - n), (0, 0)))   # padded rows -> junk logits, sliced off

    out = pl.pallas_call(
        _lenet_kernel,
        out_shape=jax.ShapeDtypeStruct((n_pad, 128), jnp.float32),
        grid=(n_pad // bt,),
        in_specs=[
            pl.BlockSpec((bt, 784), lambda b: (b, 0)),      # input tile
            pl.BlockSpec((140, 144), lambda b: (0, 0)),     # conv1 banded w (bf16)
            pl.BlockSpec((1, 72), lambda b: (0, 0)),        # conv1 bias
            pl.BlockSpec((360, 128), lambda b: (0, 0)),     # conv2 banded w (bf16)
            pl.BlockSpec((1, 64), lambda b: (0, 0)),        # conv2 bias
            pl.BlockSpec((256, 128), lambda b: (0, 0)),     # fc1 w (permuted, padded)
            pl.BlockSpec((1, 128), lambda b: (0, 0)),       # fc1 b
            pl.BlockSpec((128, 128), lambda b: (0, 0)),     # fc2 w
            pl.BlockSpec((1, 128), lambda b: (0, 0)),       # fc2 b
            pl.BlockSpec((128, 128), lambda b: (0, 0)),     # fc3 w
            pl.BlockSpec((1, 128), lambda b: (0, 0)),       # fc3 b
        ],
        out_specs=pl.BlockSpec((bt, 128), lambda b: (b, 0)),
        compiler_params=pltpu.CompilerParams(
            dimension_semantics=("parallel",),
            vmem_limit_bytes=48 * 1024 * 1024,   # <= v7x 64 MiB; covers v5e's 16 MiB default
        ),
    )(x, packed["w1"], packed["b1"], packed["w2"], packed["b2"],
      packed["w1p"], packed["b1p"], packed["w2p"], packed["b2p"],
      packed["w3p"], packed["b3p"])

    return out[:n, :10]


if __name__ == "__main__":
    key = jax.random.PRNGKey(0)
    kp, kx = jax.random.split(key)
    params = init_params(kp)
    packed = pack_params(params)              # one-time weight packing (outside jit)
    # fc1 (16*4*4) pins the input to 28x28x1; keep the batch small for the demo.
    x = jax.random.normal(kx, (2, 1, 28, 28), jnp.float32)
    fwd = jax.jit(lenet_forward)
    out = jax.block_until_ready(fwd(packed, x))
    assert out.shape == (2, 10) and out.dtype == jnp.float32
    assert bool(jnp.all(jnp.isfinite(out)))
    print("KERNEL_OK")
</pallas_src>

<mosaic_0001>
module attributes {stable_mosaic.version = 11 : i64} {
  func.func @_lenet_kernel(%arg0: i32, %arg1: memref<8x784xf32, #tpu.memory_space<vmem>>, %arg2: memref<140x144xbf16, #tpu.memory_space<vmem>>, %arg3: memref<1x72xf32, #tpu.memory_space<vmem>>, %arg4: memref<360x128xbf16, #tpu.memory_space<vmem>>, %arg5: memref<1x64xf32, #tpu.memory_space<vmem>>, %arg6: memref<256x128xbf16, #tpu.memory_space<vmem>>, %arg7: memref<1x128xf32, #tpu.memory_space<vmem>>, %arg8: memref<128x128xbf16, #tpu.memory_space<vmem>>, %arg9: memref<1x128xf32, #tpu.memory_space<vmem>>, %arg10: memref<128x128xbf16, #tpu.memory_space<vmem>>, %arg11: memref<1x128xf32, #tpu.memory_space<vmem>>, %arg12: memref<8x128xf32, #tpu.memory_space<vmem>>) attributes {dimension_semantics = [#tpu.dimension_semantics<parallel>], iteration_bounds = array<i64: 1>, scalar_prefetch = 0 : i64, scratch_operands = 0 : i64, tpu.core_type = #tpu.core_type<tc>, window_params = [{transform_indices = @transform_0, window_bounds = array<i64: 8, 784>}, {pipeline_mode = #tpu.pipeline_mode<synchronous>, transform_indices = @transform_1, window_bounds = array<i64: 140, 144>}, {pipeline_mode = #tpu.pipeline_mode<synchronous>, transform_indices = @transform_2, window_bounds = array<i64: 1, 72>}, {pipeline_mode = #tpu.pipeline_mode<synchronous>, transform_indices = @transform_3, window_bounds = array<i64: 360, 128>}, {pipeline_mode = #tpu.pipeline_mode<synchronous>, transform_indices = @transform_4, window_bounds = array<i64: 1, 64>}, {pipeline_mode = #tpu.pipeline_mode<synchronous>, transform_indices = @transform_5, window_bounds = array<i64: 256, 128>}, {pipeline_mode = #tpu.pipeline_mode<synchronous>, transform_indices = @transform_6, window_bounds = array<i64: 1, 128>}, {pipeline_mode = #tpu.pipeline_mode<synchronous>, transform_indices = @transform_7, window_bounds = array<i64: 128, 128>}, {pipeline_mode = #tpu.pipeline_mode<synchronous>, transform_indices = @transform_8, window_bounds = array<i64: 1, 128>}, {pipeline_mode = #tpu.pipeline_mode<synchronous>, transform_indices = @transform_9, window_bounds = array<i64: 128, 128>}, {pipeline_mode = #tpu.pipeline_mode<synchronous>, transform_indices = @transform_10, window_bounds = array<i64: 1, 128>}, {transform_indices = @transform_11, window_bounds = array<i64: 8, 128>}]} {
    %c0 = arith.constant 0 : index
    %c0_0 = arith.constant 0 : index
    %0 = vector.load %arg2[%c0, %c0_0] : memref<140x144xbf16, #tpu.memory_space<vmem>>, vector<140x144xbf16>
    %c0_1 = arith.constant 0 : index
    %c0_2 = arith.constant 0 : index
    %1 = vector.load %arg4[%c0_1, %c0_2] : memref<360x128xbf16, #tpu.memory_space<vmem>>, vector<360x128xbf16>
    %c0_3 = arith.constant 0 : index
    %c0_4 = arith.constant 0 : index
    %2 = vector.load %arg3[%c0_3, %c0_4] : memref<1x72xf32, #tpu.memory_space<vmem>>, vector<1x72xf32>
    %c0_5 = arith.constant 0 : index
    %c0_6 = arith.constant 0 : index
    %3 = vector.load %arg5[%c0_5, %c0_6] : memref<1x64xf32, #tpu.memory_space<vmem>>, vector<1x64xf32>
    %c0_7 = arith.constant 0 : index
    %c0_8 = arith.constant 0 : index
    %4 = vector.load %arg1[%c0_7, %c0_8] : memref<8x784xf32, #tpu.memory_space<vmem>>, vector<8x140xf32>
    %c0_9 = arith.constant 0 : index
    %c28 = arith.constant 28 : index
    %5 = vector.load %arg1[%c0_9, %c28] : memref<8x784xf32, #tpu.memory_space<vmem>>, vector<8x140xf32>
    %6 = tpu.concatenate %4, %5 in 0 : vector<8x140xf32>, vector<8x140xf32> -> vector<16x140xf32>
    %7 = arith.truncf %6 : vector<16x140xf32> to vector<16x140xbf16>
    %cst = arith.constant dense<0.000000e+00> : vector<16x144xf32>
    %8 = tpu.matmul %7, %0, %cst {dimension_numbers = #tpu.dot_dimension_numbers<[1], [0], [0], [1], [0, 0, 1, 1], [], []>} : vector<16x140xbf16>, vector<140x144xbf16>, vector<16x144xf32> -> vector<16x144xf32>
    %9 = vector.extract_strided_slice %8 {offsets = [0, 0], sizes = [16, 72], strides = [1, 1]} : vector<16x144xf32> to vector<16x72xf32>
    %10 = vector.extract_strided_slice %8 {offsets = [0, 72], sizes = [16, 72], strides = [1, 1]} : vector<16x144xf32> to vector<16x72xf32>
    %11 = arith.maximumf %9, %10 : vector<16x72xf32>
    %12 = vector.extract_strided_slice %11 {offsets = [0, 0], sizes = [8, 72], strides = [1, 1]} : vector<16x72xf32> to vector<8x72xf32>
    %13 = vector.extract_strided_slice %11 {offsets = [8, 0], sizes = [8, 72], strides = [1, 1]} : vector<16x72xf32> to vector<8x72xf32>
    %14 = arith.maximumf %12, %13 : vector<8x72xf32>
    %15 = vector.broadcast %2 : vector<1x72xf32> to vector<8x72xf32>
    %16 = arith.addf %14, %15 : vector<8x72xf32>
    %cst_10 = arith.constant 0.000000e+00 : f32
    %17 = vector.broadcast %cst_10 : f32 to vector<8x72xf32>
    %18 = arith.maximumf %16, %17 : vector<8x72xf32>
    %c0_11 = arith.constant 0 : index
    %c56 = arith.constant 56 : index
    %19 = vector.load %arg1[%c0_11, %c56] : memref<8x784xf32, #tpu.memory_space<vmem>>, vector<8x140xf32>
    %c0_12 = arith.constant 0 : index
    %c84 = arith.constant 84 : index
    %20 = vector.load %arg1[%c0_12, %c84] : memref<8x784xf32, #tpu.memory_space<vmem>>, vector<8x140xf32>
    %21 = tpu.concatenate %19, %20 in 0 : vector<8x140xf32>, vector<8x140xf32> -> vector<16x140xf32>
    %22 = arith.truncf %21 : vector<16x140xf32> to vector<16x140xbf16>
    %cst_13 = arith.constant dense<0.000000e+00> : vector<16x144xf32>
    %23 = tpu.matmul %22, %0, %cst_13 {dimension_numbers = #tpu.dot_dimension_numbers<[1], [0], [0], [1], [0, 0, 1, 1], [], []>} : vector<16x140xbf16>, vector<140x144xbf16>, vector<16x144xf32> -> vector<16x144xf32>
    %24 = vector.extract_strided_slice %23 {offsets = [0, 0], sizes = [16, 72], strides = [1, 1]} : vector<16x144xf32> to vector<16x72xf32>
    %25 = vector.extract_strided_slice %23 {offsets = [0, 72], sizes = [16, 72], strides = [1, 1]} : vector<16x144xf32> to vector<16x72xf32>
    %26 = arith.maximumf %24, %25 : vector<16x72xf32>
    %27 = vector.extract_strided_slice %26 {offsets = [0, 0], sizes = [8, 72], strides = [1, 1]} : vector<16x72xf32> to vector<8x72xf32>
    %28 = vector.extract_strided_slice %26 {offsets = [8, 0], sizes = [8, 72], strides = [1, 1]} : vector<16x72xf32> to vector<8x72xf32>
    %29 = arith.maximumf %27, %28 : vector<8x72xf32>
    %30 = vector.broadcast %2 : vector<1x72xf32> to vector<8x72xf32>
    %31 = arith.addf %29, %30 : vector<8x72xf32>
    %cst_14 = arith.constant 0.000000e+00 : f32
    %32 = vector.broadcast %cst_14 : f32 to vector<8x72xf32>
    %33 = arith.maximumf %31, %32 : vector<8x72xf32>
    %c0_15 = arith.constant 0 : index
    %c112 = arith.constant 112 : index
    %34 = vector.load %arg1[%c0_15, %c112] : memref<8x784xf32, #tpu.memory_space<vmem>>, vector<8x140xf32>
    %c0_16 = arith.constant 0 : index
    %c140 = arith.constant 140 : index
    %35 = vector.load %arg1[%c0_16, %c140] : memref<8x784xf32, #tpu.memory_space<vmem>>, vector<8x140xf32>
    %36 = tpu.concatenate %34, %35 in 0 : vector<8x140xf32>, vector<8x140xf32> -> vector<16x140xf32>
    %37 = arith.truncf %36 : vector<16x140xf32> to vector<16x140xbf16>
    %cst_17 = arith.constant dense<0.000000e+00> : vector<16x144xf32>
    %38 = tpu.matmul %37, %0, %cst_17 {dimension_numbers = #tpu.dot_dimension_numbers<[1], [0], [0], [1], [0, 0, 1, 1], [], []>} : vector<16x140xbf16>, vector<140x144xbf16>, vector<16x144xf32> -> vector<16x144xf32>
    %39 = vector.extract_strided_slice %38 {offsets = [0, 0], sizes = [16, 72], strides = [1, 1]} : vector<16x144xf32> to vector<16x72xf32>
    %40 = vector.extract_strided_slice %38 {offsets = [0, 72], sizes = [16, 72], strides = [1, 1]} : vector<16x144xf32> to vector<16x72xf32>
    %41 = arith.maximumf %39, %40 : vector<16x72xf32>
    %42 = vector.extract_strided_slice %41 {offsets = [0, 0], sizes = [8, 72], strides = [1, 1]} : vector<16x72xf32> to vector<8x72xf32>
    %43 = vector.extract_strided_slice %41 {offsets = [8, 0], sizes = [8, 72], strides = [1, 1]} : vector<16x72xf32> to vector<8x72xf32>
    %44 = arith.maximumf %42, %43 : vector<8x72xf32>
    %45 = vector.broadcast %2 : vector<1x72xf32> to vector<8x72xf32>
    %46 = arith.addf %44, %45 : vector<8x72xf32>
    %cst_18 = arith.constant 0.000000e+00 : f32
    %47 = vector.broadcast %cst_18 : f32 to vector<8x72xf32>
    %48 = arith.maximumf %46, %47 : vector<8x72xf32>
    %c0_19 = arith.constant 0 : index
    %c168 = arith.constant 168 : index
    %49 = vector.load %arg1[%c0_19, %c168] : memref<8x784xf32, #tpu.memory_space<vmem>>, vector<8x140xf32>
    %c0_20 = arith.constant 0 : index
    %c196 = arith.constant 196 : index
    %50 = vector.load %arg1[%c0_20, %c196] : memref<8x784xf32, #tpu.memory_space<vmem>>, vector<8x140xf32>
    %51 = tpu.concatenate %49, %50 in 0 : vector<8x140xf32>, vector<8x140xf32> -> vector<16x140xf32>
    %52 = arith.truncf %51 : vector<16x140xf32> to vector<16x140xbf16>
    %cst_21 = arith.constant dense<0.000000e+00> : vector<16x144xf32>
    %53 = tpu.matmul %52, %0, %cst_21 {dimension_numbers = #tpu.dot_dimension_numbers<[1], [0], [0], [1], [0, 0, 1, 1], [], []>} : vector<16x140xbf16>, vector<140x144xbf16>, vector<16x144xf32> -> vector<16x144xf32>
    %54 = vector.extract_strided_slice %53 {offsets = [0, 0], sizes = [16, 72], strides = [1, 1]} : vector<16x144xf32> to vector<16x72xf32>
    %55 = vector.extract_strided_slice %53 {offsets = [0, 72], sizes = [16, 72], strides = [1, 1]} : vector<16x144xf32> to vector<16x72xf32>
    %56 = arith.maximumf %54, %55 : vector<16x72xf32>
    %57 = vector.extract_strided_slice %56 {offsets = [0, 0], sizes = [8, 72], strides = [1, 1]} : vector<16x72xf32> to vector<8x72xf32>
    %58 = vector.extract_strided_slice %56 {offsets = [8, 0], sizes = [8, 72], strides = [1, 1]} : vector<16x72xf32> to vector<8x72xf32>
    %59 = arith.maximumf %57, %58 : vector<8x72xf32>
    %60 = vector.broadcast %2 : vector<1x72xf32> to vector<8x72xf32>
    %61 = arith.addf %59, %60 : vector<8x72xf32>
    %cst_22 = arith.constant 0.000000e+00 : f32
    %62 = vector.broadcast %cst_22 : f32 to vector<8x72xf32>
    %63 = arith.maximumf %61, %62 : vector<8x72xf32>
    %c0_23 = arith.constant 0 : index
    %c224 = arith.constant 224 : index
    %64 = vector.load %arg1[%c0_23, %c224] : memref<8x784xf32, #tpu.memory_space<vmem>>, vector<8x140xf32>
    %c0_24 = arith.constant 0 : index
    %c252 = arith.constant 252 : index
    %65 = vector.load %arg1[%c0_24, %c252] : memref<8x784xf32, #tpu.memory_space<vmem>>, vector<8x140xf32>
    %66 = tpu.concatenate %64, %65 in 0 : vector<8x140xf32>, vector<8x140xf32> -> vector<16x140xf32>
    %67 = arith.truncf %66 : vector<16x140xf32> to vector<16x140xbf16>
    %cst_25 = arith.constant dense<0.000000e+00> : vector<16x144xf32>
    %68 = tpu.matmul %67, %0, %cst_25 {dimension_numbers = #tpu.dot_dimension_numbers<[1], [0], [0], [1], [0, 0, 1, 1], [], []>} : vector<16x140xbf16>, vector<140x144xbf16>, vector<16x144xf32> -> vector<16x144xf32>
    %69 = vector.extract_strided_slice %68 {offsets = [0, 0], sizes = [16, 72], strides = [1, 1]} : vector<16x144xf32> to vector<16x72xf32>
    %70 = vector.extract_strided_slice %68 {offsets = [0, 72], sizes = [16, 72], strides = [1, 1]} : vector<16x144xf32> to vector<16x72xf32>
    %71 = arith.maximumf %69, %70 : vector<16x72xf32>
    %72 = vector.extract_strided_slice %71 {offsets = [0, 0], sizes = [8, 72], strides = [1, 1]} : vector<16x72xf32> to vector<8x72xf32>
    %73 = vector.extract_strided_slice %71 {offsets = [8, 0], sizes = [8, 72], strides = [1, 1]} : vector<16x72xf32> to vector<8x72xf32>
    %74 = arith.maximumf %72, %73 : vector<8x72xf32>
    %75 = vector.broadcast %2 : vector<1x72xf32> to vector<8x72xf32>
    %76 = arith.addf %74, %75 : vector<8x72xf32>
    %cst_26 = arith.constant 0.000000e+00 : f32
    %77 = vector.broadcast %cst_26 : f32 to vector<8x72xf32>
    %78 = arith.maximumf %76, %77 : vector<8x72xf32>
    %c0_27 = arith.constant 0 : index
    %c280 = arith.constant 280 : index
    %79 = vector.load %arg1[%c0_27, %c280] : memref<8x784xf32, #tpu.memory_space<vmem>>, vector<8x140xf32>
    %c0_28 = arith.constant 0 : index
    %c308 = arith.constant 308 : index
    %80 = vector.load %arg1[%c0_28, %c308] : memref<8x784xf32, #tpu.memory_space<vmem>>, vector<8x140xf32>
    %81 = tpu.concatenate %79, %80 in 0 : vector<8x140xf32>, vector<8x140xf32> -> vector<16x140xf32>
    %82 = arith.truncf %81 : vector<16x140xf32> to vector<16x140xbf16>
    %cst_29 = arith.constant dense<0.000000e+00> : vector<16x144xf32>
    %83 = tpu.matmul %82, %0, %cst_29 {dimension_numbers = #tpu.dot_dimension_numbers<[1], [0], [0], [1], [0, 0, 1, 1], [], []>} : vector<16x140xbf16>, vector<140x144xbf16>, vector<16x144xf32> -> vector<16x144xf32>
    %84 = vector.extract_strided_slice %83 {offsets = [0, 0], sizes = [16, 72], strides = [1, 1]} : vector<16x144xf32> to vector<16x72xf32>
    %85 = vector.extract_strided_slice %83 {offsets = [0, 72], sizes = [16, 72], strides = [1, 1]} : vector<16x144xf32> to vector<16x72xf32>
    %86 = arith.maximumf %84, %85 : vector<16x72xf32>
    %87 = vector.extract_strided_slice %86 {offsets = [0, 0], sizes = [8, 72], strides = [1, 1]} : vector<16x72xf32> to vector<8x72xf32>
    %88 = vector.extract_strided_slice %86 {offsets = [8, 0], sizes = [8, 72], strides = [1, 1]} : vector<16x72xf32> to vector<8x72xf32>
    %89 = arith.maximumf %87, %88 : vector<8x72xf32>
    %90 = vector.broadcast %2 : vector<1x72xf32> to vector<8x72xf32>
    %91 = arith.addf %89, %90 : vector<8x72xf32>
    %cst_30 = arith.constant 0.000000e+00 : f32
    %92 = vector.broadcast %cst_30 : f32 to vector<8x72xf32>
    %93 = arith.maximumf %91, %92 : vector<8x72xf32>
    %c0_31 = arith.constant 0 : index
    %c336 = arith.constant 336 : index
    %94 = vector.load %arg1[%c0_31, %c336] : memref<8x784xf32, #tpu.memory_space<vmem>>, vector<8x140xf32>
    %c0_32 = arith.constant 0 : index
    %c364 = arith.constant 364 : index
    %95 = vector.load %arg1[%c0_32, %c364] : memref<8x784xf32, #tpu.memory_space<vmem>>, vector<8x140xf32>
    %96 = tpu.concatenate %94, %95 in 0 : vector<8x140xf32>, vector<8x140xf32> -> vector<16x140xf32>
    %97 = arith.truncf %96 : vector<16x140xf32> to vector<16x140xbf16>
    %cst_33 = arith.constant dense<0.000000e+00> : vector<16x144xf32>
    %98 = tpu.matmul %97, %0, %cst_33 {dimension_numbers = #tpu.dot_dimension_numbers<[1], [0], [0], [1], [0, 0, 1, 1], [], []>} : vector<16x140xbf16>, vector<140x144xbf16>, vector<16x144xf32> -> vector<16x144xf32>
    %99 = vector.extract_strided_slice %98 {offsets = [0, 0], sizes = [16, 72], strides = [1, 1]} : vector<16x144xf32> to vector<16x72xf32>
    %100 = vector.extract_strided_slice %98 {offsets = [0, 72], sizes = [16, 72], strides = [1, 1]} : vector<16x144xf32> to vector<16x72xf32>
    %101 = arith.maximumf %99, %100 : vector<16x72xf32>
    %102 = vector.extract_strided_slice %101 {offsets = [0, 0], sizes = [8, 72], strides = [1, 1]} : vector<16x72xf32> to vector<8x72xf32>
    %103 = vector.extract_strided_slice %101 {offsets = [8, 0], sizes = [8, 72], strides = [1, 1]} : vector<16x72xf32> to vector<8x72xf32>
    %104 = arith.maximumf %102, %103 : vector<8x72xf32>
    %105 = vector.broadcast %2 : vector<1x72xf32> to vector<8x72xf32>
    %106 = arith.addf %104, %105 : vector<8x72xf32>
    %cst_34 = arith.constant 0.000000e+00 : f32
    %107 = vector.broadcast %cst_34 : f32 to vector<8x72xf32>
    %108 = arith.maximumf %106, %107 : vector<8x72xf32>
    %c0_35 = arith.constant 0 : index
    %c392 = arith.constant 392 : index
    %109 = vector.load %arg1[%c0_35, %c392] : memref<8x784xf32, #tpu.memory_space<vmem>>, vector<8x140xf32>
    %c0_36 = arith.constant 0 : index
    %c420 = arith.constant 420 : index
    %110 = vector.load %arg1[%c0_36, %c420] : memref<8x784xf32, #tpu.memory_space<vmem>>, vector<8x140xf32>
    %111 = tpu.concatenate %109, %110 in 0 : vector<8x140xf32>, vector<8x140xf32> -> vector<16x140xf32>
    %112 = arith.truncf %111 : vector<16x140xf32> to vector<16x140xbf16>
    %cst_37 = arith.constant dense<0.000000e+00> : vector<16x144xf32>
    %113 = tpu.matmul %112, %0, %cst_37 {dimension_numbers = #tpu.dot_dimension_numbers<[1], [0], [0], [1], [0, 0, 1, 1], [], []>} : vector<16x140xbf16>, vector<140x144xbf16>, vector<16x144xf32> -> vector<16x144xf32>
    %114 = vector.extract_strided_slice %113 {offsets = [0, 0], sizes = [16, 72], strides = [1, 1]} : vector<16x144xf32> to vector<16x72xf32>
    %115 = vector.extract_strided_slice %113 {offsets = [0, 72], sizes = [16, 72], strides = [1, 1]} : vector<16x144xf32> to vector<16x72xf32>
    %116 = arith.maximumf %114, %115 : vector<16x72xf32>
    %117 = vector.extract_strided_slice %116 {offsets = [0, 0], sizes = [8, 72], strides = [1, 1]} : vector<16x72xf32> to vector<8x72xf32>
    %118 = vector.extract_strided_slice %116 {offsets = [8, 0], sizes = [8, 72], strides = [1, 1]} : vector<16x72xf32> to vector<8x72xf32>
    %119 = arith.maximumf %117, %118 : vector<8x72xf32>
    %120 = vector.broadcast %2 : vector<1x72xf32> to vector<8x72xf32>
    %121 = arith.addf %119, %120 : vector<8x72xf32>
    %cst_38 = arith.constant 0.000000e+00 : f32
    %122 = vector.broadcast %cst_38 : f32 to vector<8x72xf32>
    %123 = arith.maximumf %121, %122 : vector<8x72xf32>
    %c0_39 = arith.constant 0 : index
    %c448 = arith.constant 448 : index
    %124 = vector.load %arg1[%c0_39, %c448] : memref<8x784xf32, #tpu.memory_space<vmem>>, vector<8x140xf32>
    %c0_40 = arith.constant 0 : index
    %c476 = arith.constant 476 : index
    %125 = vector.load %arg1[%c0_40, %c476] : memref<8x784xf32, #tpu.memory_space<vmem>>, vector<8x140xf32>
    %126 = tpu.concatenate %124, %125 in 0 : vector<8x140xf32>, vector<8x140xf32> -> vector<16x140xf32>
    %127 = arith.truncf %126 : vector<16x140xf32> to vector<16x140xbf16>
    %cst_41 = arith.constant dense<0.000000e+00> : vector<16x144xf32>
    %128 = tpu.matmul %127, %0, %cst_41 {dimension_numbers = #tpu.dot_dimension_numbers<[1], [0], [0], [1], [0, 0, 1, 1], [], []>} : vector<16x140xbf16>, vector<140x144xbf16>, vector<16x144xf32> -> vector<16x144xf32>
    %129 = vector.extract_strided_slice %128 {offsets = [0, 0], sizes = [16, 72], strides = [1, 1]} : vector<16x144xf32> to vector<16x72xf32>
    %130 = vector.extract_strided_slice %128 {offsets = [0, 72], sizes = [16, 72], strides = [1, 1]} : vector<16x144xf32> to vector<16x72xf32>
    %131 = arith.maximumf %129, %130 : vector<16x72xf32>
    %132 = vector.extract_strided_slice %131 {offsets = [0, 0], sizes = [8, 72], strides = [1, 1]} : vector<16x72xf32> to vector<8x72xf32>
    %133 = vector.extract_strided_slice %131 {offsets = [8, 0], sizes = [8, 72], strides = [1, 1]} : vector<16x72xf32> to vector<8x72xf32>
    %134 = arith.maximumf %132, %133 : vector<8x72xf32>
    %135 = vector.broadcast %2 : vector<1x72xf32> to vector<8x72xf32>
    %136 = arith.addf %134, %135 : vector<8x72xf32>
    %cst_42 = arith.constant 0.000000e+00 : f32
    %137 = vector.broadcast %cst_42 : f32 to vector<8x72xf32>
    %138 = arith.maximumf %136, %137 : vector<8x72xf32>
    %c0_43 = arith.constant 0 : index
    %c504 = arith.constant 504 : index
    %139 = vector.load %arg1[%c0_43, %c504] : memref<8x784xf32, #tpu.memory_space<vmem>>, vector<8x140xf32>
    %c0_44 = arith.constant 0 : index
    %c532 = arith.constant 532 : index
    %140 = vector.load %arg1[%c0_44, %c532] : memref<8x784xf32, #tpu.memory_space<vmem>>, vector<8x140xf32>
    %141 = tpu.concatenate %139, %140 in 0 : vector<8x140xf32>, vector<8x140xf32> -> vector<16x140xf32>
    %142 = arith.truncf %141 : vector<16x140xf32> to vector<16x140xbf16>
    %cst_45 = arith.constant dense<0.000000e+00> : vector<16x144xf32>
    %143 = tpu.matmul %142, %0, %cst_45 {dimension_numbers = #tpu.dot_dimension_numbers<[1], [0], [0], [1], [0, 0, 1, 1], [], []>} : vector<16x140xbf16>, vector<140x144xbf16>, vector<16x144xf32> -> vector<16x144xf32>
    %144 = vector.extract_strided_slice %143 {offsets = [0, 0], sizes = [16, 72], strides = [1, 1]} : vector<16x144xf32> to vector<16x72xf32>
    %145 = vector.extract_strided_slice %143 {offsets = [0, 72], sizes = [16, 72], strides = [1, 1]} : vector<16x144xf32> to vector<16x72xf32>
    %146 = arith.maximumf %144, %145 : vector<16x72xf32>
    %147 = vector.extract_strided_slice %146 {offsets = [0, 0], sizes = [8, 72], strides = [1, 1]} : vector<16x72xf32> to vector<8x72xf32>
    %148 = vector.extract_strided_slice %146 {offsets = [8, 0], sizes = [8, 72], strides = [1, 1]} : vector<16x72xf32> to vector<8x72xf32>
    %149 = arith.maximumf %147, %148 : vector<8x72xf32>
    %150 = vector.broadcast %2 : vector<1x72xf32> to vector<8x72xf32>
    %151 = arith.addf %149, %150 : vector<8x72xf32>
    %cst_46 = arith.constant 0.000000e+00 : f32
    %152 = vector.broadcast %cst_46 : f32 to vector<8x72xf32>
    %153 = arith.maximumf %151, %152 : vector<8x72xf32>
    %c0_47 = arith.constant 0 : index
    %c560 = arith.constant 560 : index
    %154 = vector.load %arg1[%c0_47, %c560] : memref<8x784xf32, #tpu.memory_space<vmem>>, vector<8x140xf32>
    %c0_48 = arith.constant 0 : index
    %c588 = arith.constant 588 : index
    %155 = vector.load %arg1[%c0_48, %c588] : memref<8x784xf32, #tpu.memory_space<vmem>>, vector<8x140xf32>
    %156 = tpu.concatenate %154, %155 in 0 : vector<8x140xf32>, vector<8x140xf32> -> vector<16x140xf32>
    %157 = arith.truncf %156 : vector<16x140xf32> to vector<16x140xbf16>
    %cst_49 = arith.constant dense<0.000000e+00> : vector<16x144xf32>
    %158 = tpu.matmul %157, %0, %cst_49 {dimension_numbers = #tpu.dot_dimension_numbers<[1], [0], [0], [1], [0, 0, 1, 1], [], []>} : vector<16x140xbf16>, vector<140x144xbf16>, vector<16x144xf32> -> vector<16x144xf32>
    %159 = vector.extract_strided_slice %158 {offsets = [0, 0], sizes = [16, 72], strides = [1, 1]} : vector<16x144xf32> to vector<16x72xf32>
    %160 = vector.extract_strided_slice %158 {offsets = [0, 72], sizes = [16, 72], strides = [1, 1]} : vector<16x144xf32> to vector<16x72xf32>
    %161 = arith.maximumf %159, %160 : vector<16x72xf32>
    %162 = vector.extract_strided_slice %161 {offsets = [0, 0], sizes = [8, 72], strides = [1, 1]} : vector<16x72xf32> to vector<8x72xf32>
    %163 = vector.extract_strided_slice %161 {offsets = [8, 0], sizes = [8, 72], strides = [1, 1]} : vector<16x72xf32> to vector<8x72xf32>
    %164 = arith.maximumf %162, %163 : vector<8x72xf32>
    %165 = vector.broadcast %2 : vector<1x72xf32> to vector<8x72xf32>
    %166 = arith.addf %164, %165 : vector<8x72xf32>
    %cst_50 = arith.constant 0.000000e+00 : f32
    %167 = vector.broadcast %cst_50 : f32 to vector<8x72xf32>
    %168 = arith.maximumf %166, %167 : vector<8x72xf32>
    %c0_51 = arith.constant 0 : index
    %c616 = arith.constant 616 : index
    %169 = vector.load %arg1[%c0_51, %c616] : memref<8x784xf32, #tpu.memory_space<vmem>>, vector<8x140xf32>
    %c0_52 = arith.constant 0 : index
    %c644 = arith.constant 644 : index
    %170 = vector.load %arg1[%c0_52, %c644] : memref<8x784xf32, #tpu.memory_space<vmem>>, vector<8x140xf32>
    %171 = tpu.concatenate %169, %170 in 0 : vector<8x140xf32>, vector<8x140xf32> -> vector<16x140xf32>
    %172 = arith.truncf %171 : vector<16x140xf32> to vector<16x140xbf16>
    %cst_53 = arith.constant dense<0.000000e+00> : vector<16x144xf32>
    %173 = tpu.matmul %172, %0, %cst_53 {dimension_numbers = #tpu.dot_dimension_numbers<[1], [0], [0], [1], [0, 0, 1, 1], [], []>} : vector<16x140xbf16>, vector<140x144xbf16>, vector<16x144xf32> -> vector<16x144xf32>
    %174 = vector.extract_strided_slice %173 {offsets = [0, 0], sizes = [16, 72], strides = [1, 1]} : vector<16x144xf32> to vector<16x72xf32>
    %175 = vector.extract_strided_slice %173 {offsets = [0, 72], sizes = [16, 72], strides = [1, 1]} : vector<16x144xf32> to vector<16x72xf32>
    %176 = arith.maximumf %174, %175 : vector<16x72xf32>
    %177 = vector.extract_strided_slice %176 {offsets = [0, 0], sizes = [8, 72], strides = [1, 1]} : vector<16x72xf32> to vector<8x72xf32>
    %178 = vector.extract_strided_slice %176 {offsets = [8, 0], sizes = [8, 72], strides = [1, 1]} : vector<16x72xf32> to vector<8x72xf32>
    %179 = arith.maximumf %177, %178 : vector<8x72xf32>
    %180 = vector.broadcast %2 : vector<1x72xf32> to vector<8x72xf32>
    %181 = arith.addf %179, %180 : vector<8x72xf32>
    %cst_54 = arith.constant 0.000000e+00 : f32
    %182 = vector.broadcast %cst_54 : f32 to vector<8x72xf32>
    %183 = arith.maximumf %181, %182 : vector<8x72xf32>
    %184 = tpu.concatenate %18, %33, %48, %63, %78 in 1 : vector<8x72xf32>, vector<8x72xf32>, vector<8x72xf32>, vector<8x72xf32>, vector<8x72xf32> -> vector<8x360xf32>
    %185 = tpu.concatenate %33, %48, %63, %78, %93 in 1 : vector<8x72xf32>, vector<8x72xf32>, vector<8x72xf32>, vector<8x72xf32>, vector<8x72xf32> -> vector<8x360xf32>
    %186 = tpu.concatenate %184, %185 in 0 : vector<8x360xf32>, vector<8x360xf32> -> vector<16x360xf32>
    %187 = arith.truncf %186 : vector<16x360xf32> to vector<16x360xbf16>
    %cst_55 = arith.constant dense<0.000000e+00> : vector<16x128xf32>
    %188 = tpu.matmul %187, %1, %cst_55 {dimension_numbers = #tpu.dot_dimension_numbers<[1], [0], [0], [1], [0, 0, 1, 1], [], []>} : vector<16x360xbf16>, vector<360x128xbf16>, vector<16x128xf32> -> vector<16x128xf32>
    %189 = vector.extract_strided_slice %188 {offsets = [0, 0], sizes = [16, 64], strides = [1, 1]} : vector<16x128xf32> to vector<16x64xf32>
    %190 = vector.extract_strided_slice %188 {offsets = [0, 64], sizes = [16, 64], strides = [1, 1]} : vector<16x128xf32> to vector<16x64xf32>
    %191 = arith.maximumf %189, %190 : vector<16x64xf32>
    %192 = vector.extract_strided_slice %191 {offsets = [0, 0], sizes = [8, 64], strides = [1, 1]} : vector<16x64xf32> to vector<8x64xf32>
    %193 = vector.extract_strided_slice %191 {offsets = [8, 0], sizes = [8, 64], strides = [1, 1]} : vector<16x64xf32> to vector<8x64xf32>
    %194 = arith.maximumf %192, %193 : vector<8x64xf32>
    %195 = vector.broadcast %3 : vector<1x64xf32> to vector<8x64xf32>
    %196 = arith.addf %194, %195 : vector<8x64xf32>
    %cst_56 = arith.constant 0.000000e+00 : f32
    %197 = vector.broadcast %cst_56 : f32 to vector<8x64xf32>
    %198 = arith.maximumf %196, %197 : vector<8x64xf32>
    %199 = tpu.concatenate %48, %63, %78, %93, %108 in 1 : vector<8x72xf32>, vector<8x72xf32>, vector<8x72xf32>, vector<8x72xf32>, vector<8x72xf32> -> vector<8x360xf32>
    %200 = tpu.concatenate %63, %78, %93, %108, %123 in 1 : vector<8x72xf32>, vector<8x72xf32>, vector<8x72xf32>, vector<8x72xf32>, vector<8x72xf32> -> vector<8x360xf32>
    %201 = tpu.concatenate %199, %200 in 0 : vector<8x360xf32>, vector<8x360xf32> -> vector<16x360xf32>
    %202 = arith.truncf %201 : vector<16x360xf32> to vector<16x360xbf16>
    %cst_57 = arith.constant dense<0.000000e+00> : vector<16x128xf32>
    %203 = tpu.matmul %202, %1, %cst_57 {dimension_numbers = #tpu.dot_dimension_numbers<[1], [0], [0], [1], [0, 0, 1, 1], [], []>} : vector<16x360xbf16>, vector<360x128xbf16>, vector<16x128xf32> -> vector<16x128xf32>
    %204 = vector.extract_strided_slice %203 {offsets = [0, 0], sizes = [16, 64], strides = [1, 1]} : vector<16x128xf32> to vector<16x64xf32>
    %205 = vector.extract_strided_slice %203 {offsets = [0, 64], sizes = [16, 64], strides = [1, 1]} : vector<16x128xf32> to vector<16x64xf32>
    %206 = arith.maximumf %204, %205 : vector<16x64xf32>
    %207 = vector.extract_strided_slice %206 {offsets = [0, 0], sizes = [8, 64], strides = [1, 1]} : vector<16x64xf32> to vector<8x64xf32>
    %208 = vector.extract_strided_slice %206 {offsets = [8, 0], sizes = [8, 64], strides = [1, 1]} : vector<16x64xf32> to vector<8x64xf32>
    %209 = arith.maximumf %207, %208 : vector<8x64xf32>
    %210 = vector.broadcast %3 : vector<1x64xf32> to vector<8x64xf32>
    %211 = arith.addf %209, %210 : vector<8x64xf32>
    %cst_58 = arith.constant 0.000000e+00 : f32
    %212 = vector.broadcast %cst_58 : f32 to vector<8x64xf32>
    %213 = arith.maximumf %211, %212 : vector<8x64xf32>
    %214 = tpu.concatenate %78, %93, %108, %123, %138 in 1 : vector<8x72xf32>, vector<8x72xf32>, vector<8x72xf32>, vector<8x72xf32>, vector<8x72xf32> -> vector<8x360xf32>
    %215 = tpu.concatenate %93, %108, %123, %138, %153 in 1 : vector<8x72xf32>, vector<8x72xf32>, vector<8x72xf32>, vector<8x72xf32>, vector<8x72xf32> -> vector<8x360xf32>
    %216 = tpu.concatenate %214, %215 in 0 : vector<8x360xf32>, vector<8x360xf32> -> vector<16x360xf32>
    %217 = arith.truncf %216 : vector<16x360xf32> to vector<16x360xbf16>
    %cst_59 = arith.constant dense<0.000000e+00> : vector<16x128xf32>
    %218 = tpu.matmul %217, %1, %cst_59 {dimension_numbers = #tpu.dot_dimension_numbers<[1], [0], [0], [1], [0, 0, 1, 1], [], []>} : vector<16x360xbf16>, vector<360x128xbf16>, vector<16x128xf32> -> vector<16x128xf32>
    %219 = vector.extract_strided_slice %218 {offsets = [0, 0], sizes = [16, 64], strides = [1, 1]} : vector<16x128xf32> to vector<16x64xf32>
    %220 = vector.extract_strided_slice %218 {offsets = [0, 64], sizes = [16, 64], strides = [1, 1]} : vector<16x128xf32> to vector<16x64xf32>
    %221 = arith.maximumf %219, %220 : vector<16x64xf32>
    %222 = vector.extract_strided_slice %221 {offsets = [0, 0], sizes = [8, 64], strides = [1, 1]} : vector<16x64xf32> to vector<8x64xf32>
    %223 = vector.extract_strided_slice %221 {offsets = [8, 0], sizes = [8, 64], strides = [1, 1]} : vector<16x64xf32> to vector<8x64xf32>
    %224 = arith.maximumf %222, %223 : vector<8x64xf32>
    %225 = vector.broadcast %3 : vector<1x64xf32> to vector<8x64xf32>
    %226 = arith.addf %224, %225 : vector<8x64xf32>
    %cst_60 = arith.constant 0.000000e+00 : f32
    %227 = vector.broadcast %cst_60 : f32 to vector<8x64xf32>
    %228 = arith.maximumf %226, %227 : vector<8x64xf32>
    %229 = tpu.concatenate %108, %123, %138, %153, %168 in 1 : vector<8x72xf32>, vector<8x72xf32>, vector<8x72xf32>, vector<8x72xf32>, vector<8x72xf32> -> vector<8x360xf32>
    %230 = tpu.concatenate %123, %138, %153, %168, %183 in 1 : vector<8x72xf32>, vector<8x72xf32>, vector<8x72xf32>, vector<8x72xf32>, vector<8x72xf32> -> vector<8x360xf32>
    %231 = tpu.concatenate %229, %230 in 0 : vector<8x360xf32>, vector<8x360xf32> -> vector<16x360xf32>
    %232 = arith.truncf %231 : vector<16x360xf32> to vector<16x360xbf16>
    %cst_61 = arith.constant dense<0.000000e+00> : vector<16x128xf32>
    %233 = tpu.matmul %232, %1, %cst_61 {dimension_numbers = #tpu.dot_dimension_numbers<[1], [0], [0], [1], [0, 0, 1, 1], [], []>} : vector<16x360xbf16>, vector<360x128xbf16>, vector<16x128xf32> -> vector<16x128xf32>
    %234 = vector.extract_strided_slice %233 {offsets = [0, 0], sizes = [16, 64], strides = [1, 1]} : vector<16x128xf32> to vector<16x64xf32>
    %235 = vector.extract_strided_slice %233 {offsets = [0, 64], sizes = [16, 64], strides = [1, 1]} : vector<16x128xf32> to vector<16x64xf32>
    %236 = arith.maximumf %234, %235 : vector<16x64xf32>
    %237 = vector.extract_strided_slice %236 {offsets = [0, 0], sizes = [8, 64], strides = [1, 1]} : vector<16x64xf32> to vector<8x64xf32>
    %238 = vector.extract_strided_slice %236 {offsets = [8, 0], sizes = [8, 64], strides = [1, 1]} : vector<16x64xf32> to vector<8x64xf32>
    %239 = arith.maximumf %237, %238 : vector<8x64xf32>
    %240 = vector.broadcast %3 : vector<1x64xf32> to vector<8x64xf32>
    %241 = arith.addf %239, %240 : vector<8x64xf32>
    %cst_62 = arith.constant 0.000000e+00 : f32
    %242 = vector.broadcast %cst_62 : f32 to vector<8x64xf32>
    %243 = arith.maximumf %241, %242 : vector<8x64xf32>
    %244 = tpu.concatenate %198, %213, %228, %243 in 1 : vector<8x64xf32>, vector<8x64xf32>, vector<8x64xf32>, vector<8x64xf32> -> vector<8x256xf32>
    %245 = arith.truncf %244 : vector<8x256xf32> to vector<8x256xbf16>
    %c0_63 = arith.constant 0 : index
    %c0_64 = arith.constant 0 : index
    %246 = vector.load %arg6[%c0_63, %c0_64] : memref<256x128xbf16, #tpu.memory_space<vmem>>, vector<256x128xbf16>
    %cst_65 = arith.constant dense<0.000000e+00> : vector<8x128xf32>
    %247 = tpu.matmul %245, %246, %cst_65 {dimension_numbers = #tpu.dot_dimension_numbers<[1], [0], [0], [1], [0, 0, 1, 1], [], []>} : vector<8x256xbf16>, vector<256x128xbf16>, vector<8x128xf32> -> vector<8x128xf32>
    %c0_66 = arith.constant 0 : index
    %c0_67 = arith.constant 0 : index
    %248 = vector.load %arg7[%c0_66, %c0_67] : memref<1x128xf32, #tpu.memory_space<vmem>>, vector<1x128xf32>
    %249 = vector.broadcast %248 : vector<1x128xf32> to vector<8x128xf32>
    %250 = arith.addf %247, %249 : vector<8x128xf32>
    %cst_68 = arith.constant 0.000000e+00 : f32
    %251 = vector.broadcast %cst_68 : f32 to vector<8x128xf32>
    %252 = arith.maximumf %250, %251 : vector<8x128xf32>
    %253 = arith.truncf %252 : vector<8x128xf32> to vector<8x128xbf16>
    %c0_69 = arith.constant 0 : index
    %c0_70 = arith.constant 0 : index
    %254 = vector.load %arg8[%c0_69, %c0_70] : memref<128x128xbf16, #tpu.memory_space<vmem>>, vector<128x128xbf16>
    %cst_71 = arith.constant dense<0.000000e+00> : vector<8x128xf32>
    %255 = tpu.matmul %253, %254, %cst_71 {dimension_numbers = #tpu.dot_dimension_numbers<[1], [0], [0], [1], [0, 0, 1, 1], [], []>} : vector<8x128xbf16>, vector<128x128xbf16>, vector<8x128xf32> -> vector<8x128xf32>
    %c0_72 = arith.constant 0 : index
    %c0_73 = arith.constant 0 : index
    %256 = vector.load %arg9[%c0_72, %c0_73] : memref<1x128xf32, #tpu.memory_space<vmem>>, vector<1x128xf32>
    %257 = vector.broadcast %256 : vector<1x128xf32> to vector<8x128xf32>
    %258 = arith.addf %255, %257 : vector<8x128xf32>
    %cst_74 = arith.constant 0.000000e+00 : f32
    %259 = vector.broadcast %cst_74 : f32 to vector<8x128xf32>
    %260 = arith.maximumf %258, %259 : vector<8x128xf32>
    %261 = arith.truncf %260 : vector<8x128xf32> to vector<8x128xbf16>
    %c0_75 = arith.constant 0 : index
    %c0_76 = arith.constant 0 : index
    %262 = vector.load %arg10[%c0_75, %c0_76] : memref<128x128xbf16, #tpu.memory_space<vmem>>, vector<128x128xbf16>
    %cst_77 = arith.constant dense<0.000000e+00> : vector<8x128xf32>
    %263 = tpu.matmul %261, %262, %cst_77 {dimension_numbers = #tpu.dot_dimension_numbers<[1], [0], [0], [1], [0, 0, 1, 1], [], []>} : vector<8x128xbf16>, vector<128x128xbf16>, vector<8x128xf32> -> vector<8x128xf32>
    %c0_78 = arith.constant 0 : index
    %c0_79 = arith.constant 0 : index
    %264 = vector.load %arg11[%c0_78, %c0_79] : memref<1x128xf32, #tpu.memory_space<vmem>>, vector<1x128xf32>
    %265 = vector.broadcast %264 : vector<1x128xf32> to vector<8x128xf32>
    %266 = arith.addf %263, %265 : vector<8x128xf32>
    %c0_80 = arith.constant 0 : index
    %c0_81 = arith.constant 0 : index
    %267 = vector.load %arg12[%c0_80, %c0_81] : memref<8x128xf32, #tpu.memory_space<vmem>>, vector<8x128xf32>
    tpu.vector_store %arg12[%c0_80, %c0_81], %266 {strides = array<i32>} : memref<8x128xf32, #tpu.memory_space<vmem>>, vector<8x128xf32>,
    return
  }
  func.func @transform_0(%arg0: i32) -> (i32, i32) {
    %c0_i32 = arith.constant 0 : i32
    %c0_i32_0 = arith.constant 0 : i32
    return %arg0, %c0_i32 : i32, i32
  }
  func.func @transform_1(%arg0: i32) -> (i32, i32) {
    %c0_i32 = arith.constant 0 : i32
    %c0_i32_0 = arith.constant 0 : i32
    %c0_i32_1 = arith.constant 0 : i32
    return %c0_i32, %c0_i32_0 : i32, i32
  }
  func.func @transform_2(%arg0: i32) -> (i32, i32) {
    %c0_i32 = arith.constant 0 : i32
    %c0_i32_0 = arith.constant 0 : i32
    %c0_i32_1 = arith.constant 0 : i32
    return %c0_i32, %c0_i32_0 : i32, i32
  }
  func.func @transform_3(%arg0: i32) -> (i32, i32) {
    %c0_i32 = arith.constant 0 : i32
    %c0_i32_0 = arith.constant 0 : i32
    %c0_i32_1 = arith.constant 0 : i32
    return %c0_i32, %c0_i32_0 : i32, i32
  }
  func.func @transform_4(%arg0: i32) -> (i32, i32) {
    %c0_i32 = arith.constant 0 : i32
    %c0_i32_0 = arith.constant 0 : i32
    %c0_i32_1 = arith.constant 0 : i32
    return %c0_i32, %c0_i32_0 : i32, i32
  }
  func.func @transform_5(%arg0: i32) -> (i32, i32) {
    %c0_i32 = arith.constant 0 : i32
    %c0_i32_0 = arith.constant 0 : i32
    %c0_i32_1 = arith.constant 0 : i32
    return %c0_i32, %c0_i32_0 : i32, i32
  }
  func.func @transform_6(%arg0: i32) -> (i32, i32) {
    %c0_i32 = arith.constant 0 : i32
    %c0_i32_0 = arith.constant 0 : i32
    %c0_i32_1 = arith.constant 0 : i32
    return %c0_i32, %c0_i32_0 : i32, i32
  }
  func.func @transform_7(%arg0: i32) -> (i32, i32) {
    %c0_i32 = arith.constant 0 : i32
    %c0_i32_0 = arith.constant 0 : i32
    %c0_i32_1 = arith.constant 0 : i32
    return %c0_i32, %c0_i32_0 : i32, i32
  }
  func.func @transform_8(%arg0: i32) -> (i32, i32) {
    %c0_i32 = arith.constant 0 : i32
    %c0_i32_0 = arith.constant 0 : i32
    %c0_i32_1 = arith.constant 0 : i32
    return %c0_i32, %c0_i32_0 : i32, i32
  }
  func.func @transform_9(%arg0: i32) -> (i32, i32) {
    %c0_i32 = arith.constant 0 : i32
    %c0_i32_0 = arith.constant 0 : i32
    %c0_i32_1 = arith.constant 0 : i32
    return %c0_i32, %c0_i32_0 : i32, i32
  }
  func.func @transform_10(%arg0: i32) -> (i32, i32) {
    %c0_i32 = arith.constant 0 : i32
    %c0_i32_0 = arith.constant 0 : i32
    %c0_i32_1 = arith.constant 0 : i32
    return %c0_i32, %c0_i32_0 : i32, i32
  }
  func.func @transform_11(%arg0: i32) -> (i32, i32) {
    %c0_i32 = arith.constant 0 : i32
    %c0_i32_0 = arith.constant 0 : i32
    return %arg0, %c0_i32 : i32, i32
  }
}

</mosaic_0001>

<llo_original>
// kernel: lenet_forward.1
$region0: #{lenet_forward.1}
  #allocation0 [shape = 'u32[]', space=smem, size = 0x4, offset = 0x4, fixed_abs, tag = 'smem constant byte address 0x4 - core index']
  #allocation1 [shape = 'u32[144,128]{1,0:T(1,128)}', space=vmem, size = 0x12000, scoped, tag = 'internal scratch']
  %s0 = inlined_call_operand.vmem [shape: f32[8,784], index: 0, kind: input, shape index: {}]
  %s1 = inlined_call_operand.hbm [shape: bf16[140,144], index: 1, kind: input, shape index: {}]
  %s2 = inlined_call_operand.vmem [shape: f32[1,72], index: 2, kind: input, shape index: {}]
  %s3 = inlined_call_operand.vmem [shape: bf16[360,128], index: 3, kind: input, shape index: {}]
  %s4 = inlined_call_operand.vmem [shape: f32[1,64], index: 4, kind: input, shape index: {}]
  %s5 = inlined_call_operand.hbm [shape: bf16[256,128], index: 5, kind: input, shape index: {}]
  %s6 = inlined_call_operand.vmem [shape: f32[1,128], index: 6, kind: input, shape index: {}]
  %s7 = inlined_call_operand.vmem [shape: bf16[128,128], index: 7, kind: input, shape index: {}]
  %s8 = inlined_call_operand.vmem [shape: f32[1,128], index: 8, kind: input, shape index: {}]
  %s9 = inlined_call_operand.hbm [shape: bf16[128,128], index: 9, kind: input, shape index: {}]
  %s10 = inlined_call_operand.vmem [shape: f32[1,128], index: 10, kind: input, shape index: {}]
  %s11 = inlined_call_operand.vmem [shape: f32[8,128], index: 11, kind: output, shape index: {}]
  %s12 = sld [smem:[#allocation0]]
  $region66: #{lenet_forward.1} parent=0
    _
  %s14 = ssub.s32 1, %s12
  %s15 = scalar_select 0, %s14, %s12
  $region1: #{lenet_forward.1} parent=0
    #allocation2 [shape = 'u8[73728]{0}', space=vmem, size = 0x12000, scoped, tag = 'input window, operand 1, single buffered']
    #allocation3 [shape = 's32[1]{0}', space=sflag, size = 0x4, scoped, tag = 'scoped memory for lenet_forward.1']
    #allocation4 [shape = 'u8[65536]{0}', space=vmem, size = 0x10000, scoped, tag = 'input window, operand 5, single buffered']
    #allocation5 [shape = 's32[1]{0}', space=sflag, size = 0x4, scoped, tag = 'scoped memory for lenet_forward.1']
    #allocation6 [shape = 'u8[32768]{0}', space=vmem, size = 0x8000, scoped, tag = 'input window, operand 9, single buffered']
    %16 = vsyncpa [#allocation3], 0
    %17 = vsyncpa [#allocation5], 0
    // Predicated region
    $region2: #{lenet_forward.1} parent=1 // pred_check
      _
    $region3: #{lenet_forward.1} parent=1 // pred_check_branch
      %19 = sbr.rel (0) target = $region5
    $region4: #{lenet_forward.1} parent=1 // pred_region
      _
    $region5: #{lenet_forward.1} parent=1 // pred_fallthru
      _
    // Predicated region
    $region6: #{lenet_forward.1} parent=1 // pred_check
      _
    $region7: #{lenet_forward.1} parent=1 // pred_check_branch
      %21 = sbr.rel (0) target = $region9
    $region8: #{lenet_forward.1} parent=1 // pred_region
      %s23 = ssub.s32 2304, 2304
      %24 = vsyncadd [#allocation3], %s23
      %s25 = sshll.u32 [#allocation2], 4
      %s26 = int_to_ptr.vmem [resolvable:$true] %s25
      %31 = dma.hbm_to_vmem [thread:$0]  %s1, 2304, %s26, [#allocation3], 128, 128, 8
    $region9: #{lenet_forward.1} parent=1 // pred_fallthru
      _
    // Predicated region
    $region10: #{lenet_forward.1} parent=1 // pred_check
      _
    $region11: #{lenet_forward.1} parent=1 // pred_check_branch
      %33 = sbr.rel (0) target = $region13
    $region12: #{lenet_forward.1} parent=1 // pred_region
      _
    $region13: #{lenet_forward.1} parent=1 // pred_fallthru
      _
    // Predicated region
    $region14: #{lenet_forward.1} parent=1 // pred_check
      _
    $region15: #{lenet_forward.1} parent=1 // pred_check_branch
      %35 = sbr.rel (0) target = $region17
    $region16: #{lenet_forward.1} parent=1 // pred_region
      _
    $region17: #{lenet_forward.1} parent=1 // pred_fallthru
      _
    // Predicated region
    $region18: #{lenet_forward.1} parent=1 // pred_check
      _
    $region19: #{lenet_forward.1} parent=1 // pred_check_branch
      %37 = sbr.rel (0) target = $region21
    $region20: #{lenet_forward.1} parent=1 // pred_region
      _
    $region21: #{lenet_forward.1} parent=1 // pred_fallthru
      _
    // Predicated region
    $region22: #{lenet_forward.1} parent=1 // pred_check
      _
    $region23: #{lenet_forward.1} parent=1 // pred_check_branch
      %39 = sbr.rel (0) target = $region25
    $region24: #{lenet_forward.1} parent=1 // pred_region
      %s41 = ssub.s32 2048, 2048
      %42 = vsyncadd [#allocation5], %s41
      %s43 = sshll.u32 [#allocation4], 4
      %s44 = int_to_ptr.vmem [resolvable:$true] %s43
      %49 = dma.hbm_to_vmem [thread:$0]  %s5, 2048, %s44, [#allocation5], 64, 64, 4
    $region25: #{lenet_forward.1} parent=1 // pred_fallthru
      _
    // Predicated region
    $region26: #{lenet_forward.1} parent=1 // pred_check
      _
    $region27: #{lenet_forward.1} parent=1 // pred_check_branch
      %51 = sbr.rel (0) target = $region29
    $region28: #{lenet_forward.1} parent=1 // pred_region
      _
    $region29: #{lenet_forward.1} parent=1 // pred_fallthru
      _
    // Predicated region
    $region30: #{lenet_forward.1} parent=1 // pred_check
      _
    $region31: #{lenet_forward.1} parent=1 // pred_check_branch
      %53 = sbr.rel (0) target = $region33
    $region32: #{lenet_forward.1} parent=1 // pred_region
      _
    $region33: #{lenet_forward.1} parent=1 // pred_fallthru
      _
    // Predicated region
    $region34: #{lenet_forward.1} parent=1 // pred_check
      _
    $region35: #{lenet_forward.1} parent=1 // pred_check_branch
      %55 = sbr.rel (0) target = $region37
    $region36: #{lenet_forward.1} parent=1 // pred_region
      _
    $region37: #{lenet_forward.1} parent=1 // pred_fallthru
      _
    // Predicated region
    $region38: #{lenet_forward.1} parent=1 // pred_check
      _
    $region39: #{lenet_forward.1} parent=1 // pred_check_branch
      %57 = sbr.rel (0) target = $region41
    $region40: #{lenet_forward.1} parent=1 // pred_region
      %s59 = ssub.s32 1024, 1024
      %60 = vsyncadd [#allocation5], %s59
      %s61 = sshll.u32 [#allocation6], 4
      %s62 = int_to_ptr.vmem [resolvable:$true] %s61
      %67 = dma.hbm_to_vmem [thread:$0]  %s9, 1024, %s62, [#allocation5], 64, 64, 4
    $region41: #{lenet_forward.1} parent=1 // pred_fallthru
      _
    // Predicated region
    $region42: #{lenet_forward.1} parent=1 // pred_check
      _
    $region43: #{lenet_forward.1} parent=1 // pred_check_branch
      %69 = sbr.rel (0) target = $region45
    $region44: #{lenet_forward.1} parent=1 // pred_region
      _
    $region45: #{lenet_forward.1} parent=1 // pred_fallthru
      _
    // Predicated region
    $region46: #{lenet_forward.1} parent=1 // pred_check
      _
    $region47: #{lenet_forward.1} parent=1 // pred_check_branch
      %71 = sbr.rel (0) target = $region49
    $region48: #{lenet_forward.1} parent=1 // pred_region
      %72 = dma.done [#allocation3], 2304
    $region49: #{lenet_forward.1} parent=1 // pred_fallthru
      _
    // Predicated region
    $region50: #{lenet_forward.1} parent=1 // pred_check
      _
    $region51: #{lenet_forward.1} parent=1 // pred_check_branch
      %74 = sbr.rel (0) target = $region53
    $region52: #{lenet_forward.1} parent=1 // pred_region
      %75 = dma.done [#allocation5], 2048
    $region53: #{lenet_forward.1} parent=1 // pred_fallthru
      _
    // Predicated region
    $region54: #{lenet_forward.1} parent=1 // pred_check
      _
    $region55: #{lenet_forward.1} parent=1 // pred_check_branch
      %77 = sbr.rel (0) target = $region57
    $region56: #{lenet_forward.1} parent=1 // pred_region
      %78 = dma.done [#allocation5], 1024
    $region57: #{lenet_forward.1} parent=1 // pred_fallthru
      _
    %v80 = vld [vmem:[#allocation2] sm:$0xff]
    %v81 = vld [vmem:[#allocation2 + $0x8] sm:$0xff]
    %v82 = vld [vmem:[#allocation2 + $0x10] sm:$0xff]
    %v83 = vld [vmem:[#allocation2 + $0x18] sm:$0xff]
    %v84 = vld [vmem:[#allocation2 + $0x20] sm:$0xff]
    %v85 = vld [vmem:[#allocation2 + $0x28] sm:$0xff]
    %v86 = vld [vmem:[#allocation2 + $0x30] sm:$0xff]
    %v87 = vld [vmem:[#allocation2 + $0x38] sm:$0xff]
    %v88 = vld [vmem:[#allocation2 + $0x40] sm:$0xff]
    %v89 = vld [vmem:[#allocation2 + $0x48] sm:$0xff]
    %v90 = vld [vmem:[#allocation2 + $0x50] sm:$0xff]
    %v91 = vld [vmem:[#allocation2 + $0x58] sm:$0xff]
    %v92 = vld [vmem:[#allocation2 + $0x60] sm:$0xff]
    %v93 = vld [vmem:[#allocation2 + $0x68] sm:$0xff]
    %v94 = vld [vmem:[#allocation2 + $0x70] sm:$0xff]
    %v95 = vld [vmem:[#allocation2 + $0x78] sm:$0xff]
    %v96 = vld [vmem:[#allocation2 + $0x80] sm:$0xff]
    %v97 = vld [vmem:[#allocation2 + $0x88] sm:$0x33]
    %v98 = vld [vmem:[%s3] sm:$0xf]
    %v99 = vld [vmem:[%s3 + $0x4] sm:$0xf]
    %v100 = vld [vmem:[%s3 + $0x8] sm:$0xf]
    %v101 = vld [vmem:[%s3 + $0xc] sm:$0xf]
    %v102 = vld [vmem:[%s3 + $0x10] sm:$0xf]
    %v103 = vld [vmem:[%s3 + $0x14] sm:$0xf]
    %v104 = vld [vmem:[%s3 + $0x18] sm:$0xf]
    %v105 = vld [vmem:[%s3 + $0x1c] sm:$0xf]
    %v106 = vld [vmem:[%s3 + $0x20] sm:$0xf]
    %v107 = vld [vmem:[%s3 + $0x24] sm:$0xf]
    %v108 = vld [vmem:[%s3 + $0x28] sm:$0xf]
    %v109 = vld [vmem:[%s3 + $0x2c] sm:$0xf]
    %v110 = vld [vmem:[%s3 + $0x30] sm:$0xf]
    %v111 = vld [vmem:[%s3 + $0x34] sm:$0xf]
    %v112 = vld [vmem:[%s3 + $0x38] sm:$0xf]
    %v113 = vld [vmem:[%s3 + $0x3c] sm:$0xf]
    %v114 = vld [vmem:[%s3 + $0x40] sm:$0xf]
    %v115 = vld [vmem:[%s3 + $0x44] sm:$0xf]
    %v116 = vld [vmem:[%s3 + $0x48] sm:$0xf]
    %v117 = vld [vmem:[%s3 + $0x4c] sm:$0xf]
    %v118 = vld [vmem:[%s3 + $0x50] sm:$0xf]
    %v119 = vld [vmem:[%s3 + $0x54] sm:$0xf]
    %v120 = vld [vmem:[%s3 + $0x58] sm:$0xf]
    %v121 = vld [vmem:[%s3 + $0x5c] sm:$0xf]
    %v122 = vld [vmem:[%s3 + $0x60] sm:$0xf]
    %v123 = vld [vmem:[%s3 + $0x64] sm:$0xf]
    %v124 = vld [vmem:[%s3 + $0x68] sm:$0xf]
    %v125 = vld [vmem:[%s3 + $0x6c] sm:$0xf]
    %v126 = vld [vmem:[%s3 + $0x70] sm:$0xf]
    %v127 = vld [vmem:[%s3 + $0x74] sm:$0xf]
    %v128 = vld [vmem:[%s3 + $0x78] sm:$0xf]
    %v129 = vld [vmem:[%s3 + $0x7c] sm:$0xf]
    %v130 = vld [vmem:[%s3 + $0x80] sm:$0xf]
    %v131 = vld [vmem:[%s3 + $0x84] sm:$0xf]
    %v132 = vld [vmem:[%s3 + $0x88] sm:$0xf]
    %v133 = vld [vmem:[%s3 + $0x8c] sm:$0xf]
    %v134 = vld [vmem:[%s3 + $0x90] sm:$0xf]
    %v135 = vld [vmem:[%s3 + $0x94] sm:$0xf]
    %v136 = vld [vmem:[%s3 + $0x98] sm:$0xf]
    %v137 = vld [vmem:[%s3 + $0x9c] sm:$0xf]
    %v138 = vld [vmem:[%s3 + $0xa0] sm:$0xf]
    %v139 = vld [vmem:[%s3 + $0xa4] sm:$0xf]
    %v140 = vld [vmem:[%s3 + $0xa8] sm:$0xf]
    %v141 = vld [vmem:[%s3 + $0xac] sm:$0xf]
    %v142 = vld [vmem:[%s3 + $0xb0] sm:$0xf]
    %v143 = vld [vmem:[%s2] sm:$0x1]
    %v144 = vld [vmem:[%s4] sm:$0x1]
    %v145 = vld [vmem:[%s0] sm:$0xff]
    %v146 = vld [vmem:[%s0 + $0x8] sm:$0xff]
    %149 = vrot.lane.b32.xlu0 %v145, 100
    %v150 = vpop.permute.xlu0 %149
    %151 = vrot.lane.b32.xlu0 %v146, 100
    %v152 = vpop.permute.xlu0 %151
    %vm153 = vcmask 818176
    %v154 = vsel %vm153, %v150, %v152
    %v157 = vpack.c.bf16 %v154, %v145
    %v158 = vpack.c.bf16 %v152, %v146
    %v177 = vunpack.c.l.b16 %v80
    %v178 = vunpack.c.h.b16 %v80
    %v179 = vunpack.c.l.b16 %v81
    %v180 = vunpack.c.h.b16 %v81
    %v181 = vunpack.c.l.b16 %v82
    %v182 = vunpack.c.h.b16 %v82
    %v183 = vunpack.c.l.b16 %v83
    %v184 = vunpack.c.h.b16 %v83
    %v185 = vunpack.c.l.b16 %v84
    %v186 = vunpack.c.h.b16 %v84
    %v187 = vunpack.c.l.b16 %v85
    %v188 = vunpack.c.h.b16 %v85
    %v189 = vunpack.c.l.b16 %v86
    %v190 = vunpack.c.h.b16 %v86
    %v191 = vunpack.c.l.b16 %v87
    %v192 = vunpack.c.h.b16 %v87
    %v193 = vunpack.c.l.b16 %v88
    %v194 = vunpack.c.h.b16 %v88
    %v195 = vunpack.c.l.b16 %v89
    %v196 = vunpack.c.h.b16 %v89
    %v197 = vunpack.c.l.b16 %v90
    %v198 = vunpack.c.h.b16 %v90
    %v199 = vunpack.c.l.b16 %v91
    %v200 = vunpack.c.h.b16 %v91
    %v201 = vunpack.c.l.b16 %v92
    %v202 = vunpack.c.h.b16 %v92
    %v203 = vunpack.c.l.b16 %v93
    %v204 = vunpack.c.h.b16 %v93
    %v205 = vunpack.c.l.b16 %v94
    %v206 = vunpack.c.h.b16 %v94
    %v207 = vunpack.c.l.b16 %v95
    %v208 = vunpack.c.h.b16 %v95
    %v209 = vunpack.c.l.b16 %v96
    %v210 = vunpack.c.h.b16 %v96
    %v211 = vunpack.c.l.b16 %v97
    %v212 = vunpack.c.h.b16 %v97
    %v213 = vpack.c.b16 %v179, %v177
    %v214 = vpack.c.b16 %v180, %v178
    %v215 = vpack.c.b16 %v183, %v181
    %v216 = vpack.c.b16 %v184, %v182
    %v217 = vpack.c.b16 %v187, %v185
    %v218 = vpack.c.b16 %v188, %v186
    %v219 = vpack.c.b16 %v191, %v189
    %v220 = vpack.c.b16 %v192, %v190
    %v221 = vpack.c.b16 %v195, %v193
    %v222 = vpack.c.b16 %v196, %v194
    %v223 = vpack.c.b16 %v199, %v197
    %v224 = vpack.c.b16 %v200, %v198
    %v225 = vpack.c.b16 %v203, %v201
    %v226 = vpack.c.b16 %v204, %v202
    %v227 = vpack.c.b16 %v207, %v205
    %v228 = vpack.c.b16 %v208, %v206
    %v229 = vpack.c.b16 %v211, %v209
    %v230 = vpack.c.b16 %v212, %v210
    %vm247 = vcmask 97280
    %v249 = vsel %vm247, %v158, 0
    %vm251 = vcmask 1045504
    %v253 = vsel %vm251, %v229, 0
    %v256 = vsel %vm251, %v230, 0
    %258 = vmatprep.subr.bf16.mxu0 %v214
    %259 = vmatpush1.bf16.msra.mxu0 %v213
    %260 = vmatprep.subr.bf16.mxu0 %v216
    %261 = vmatpush1.bf16.msra.mxu0 %v215
    %262 = vmatprep.subr.bf16.mxu0 %v218
    %263 = vmatpush1.bf16.msra.mxu0 %v217
    %264 = vmatprep.subr.bf16.mxu0 %v220
    %265 = vmatpush1.bf16.msra.mxu0 %v219
    %266 = vmatprep.subr.bf16.mxu0 %v222
    %267 = vmatpush1.bf16.msra.mxu0 %v221
    %268 = vmatprep.subr.bf16.mxu0 %v224
    %269 = vmatpush1.bf16.msra.mxu0 %v223
    %270 = vmatprep.subr.bf16.mxu0 %v226
    %271 = vmatpush1.bf16.msra.mxu0 %v225
    %272 = vmatprep.subr.bf16.mxu0 %v228
    %273 = vmatpush1.bf16.msra.mxu0 %v227
    %274 = vmatprep.subr.bf16.mxu0 %v256
    %275 = vmatpush1.bf16.msra.mxu0 %v253
    %276 = vmatprep.subr.bf16.mxu0 0
    %277 = vmatpush1.bf16.msra.mxu0 0
    %278 = vmatprep.subr.bf16.mxu0 0
    %279 = vmatpush1.bf16.msra.mxu0 0
    %280 = vmatprep.subr.bf16.mxu0 0
    %281 = vmatpush1.bf16.msra.mxu0 0
    %282 = vmatprep.subr.bf16.mxu0 0
    %283 = vmatpush1.bf16.msra.mxu0 0
    %284 = vmatprep.subr.bf16.mxu0 0
    %285 = vmatpush1.bf16.msra.mxu0 0
    %286 = vmatprep.subr.bf16.mxu0 0
    %287 = vmatpush1.bf16.msra.mxu0 0
    %288 = vmatprep.subr.bf16.mxu0 0
    %289 = vmatpush1.bf16.msra.mxu0 0
    %290 = vmatprep.mubr.bf16.mxu0 %v249
    %291 = vmatmul.mubr.bf16.gmra.mrb[0].mxu0 %v157
    %v292 = vpop.f32.mrb[0].mxu0
    %v293 = vadd.f32 0.0, %v292
    %v294 = vpop.f32.mrb[0].mxu0
    %v295 = vadd.f32 0.0, %v294
    %v296 = vpop.f32.mrb[0].mxu0
    %v297 = vadd.f32 0.0, %v296
    %v298 = vpop.f32.mrb[0].mxu0
    %v299 = vadd.f32 0.0, %v298
    %300 = vdwg.mxu0
    %305 = vrot.lane.b32.xlu0 %v293, 56
    %v306 = vpop.permute.xlu0 %305
    %307 = vrot.lane.b32.xlu0 %v295, 56
    %v308 = vpop.permute.xlu0 %307
    %309 = vrot.lane.b32.xlu0 %v297, 56
    %v310 = vpop.permute.xlu0 %309
    %311 = vrot.lane.b32.xlu0 %v299, 56
    %v312 = vpop.permute.xlu0 %311
    %vm313 = vcmask 457728
    %v314 = vsel %vm313, %v306, %v308
    %v315 = vsel %vm313, %v310, %v312
    %v318 = vmax.f32 %v293, %v314
    %v319 = vmax.f32 %v297, %v315
    %v320 = vmax.f32 %v318, %v319
    %v322 = vlaneseq
    %v323 = vshrl.u32 %v322, 7
    %v324 = vsub.s32 0, %v323
    %v325 = vrot.slane %v143, %v324
    %v327 = vadd.f32 %v320, %v325
    %v328 = vmax.f32 %v327, 0.0
    %331 = vrot.lane.b32.xlu0 %v157, 72
    %v332 = vpop.permute.xlu0 %331
    %333 = vrot.lane.b32.xlu0 %v158, 72
    %v334 = vpop.permute.xlu0 %333
    %vm335 = vcmask 588800
    %v336 = vsel %vm335, %v332, %v334
    %v339 = vsel %vm247, %v334, 0
    %341 = vmatprep.subr.bf16.mxu0 %v214
    %342 = vmatpush1.bf16.msra.mxu0 %v213
    %343 = vmatprep.subr.bf16.mxu0 %v216
    %344 = vmatpush1.bf16.msra.mxu0 %v215
    %345 = vmatprep.subr.bf16.mxu0 %v218
    %346 = vmatpush1.bf16.msra.mxu0 %v217
    %347 = vmatprep.subr.bf16.mxu0 %v220
    %348 = vmatpush1.bf16.msra.mxu0 %v219
    %349 = vmatprep.subr.bf16.mxu0 %v222
    %350 = vmatpush1.bf16.msra.mxu0 %v221
    %351 = vmatprep.subr.bf16.mxu0 %v224
    %352 = vmatpush1.bf16.msra.mxu0 %v223
    %353 = vmatprep.subr.bf16.mxu0 %v226
    %354 = vmatpush1.bf16.msra.mxu0 %v225
    %355 = vmatprep.subr.bf16.mxu0 %v228
    %356 = vmatpush1.bf16.msra.mxu0 %v227
    %357 = vmatprep.subr.bf16.mxu0 %v256
    %358 = vmatpush1.bf16.msra.mxu0 %v253
    %359 = vmatprep.subr.bf16.mxu0 0
    %360 = vmatpush1.bf16.msra.mxu0 0
    %361 = vmatprep.subr.bf16.mxu0 0
    %362 = vmatpush1.bf16.msra.mxu0 0
    %363 = vmatprep.subr.bf16.mxu0 0
    %364 = vmatpush1.bf16.msra.mxu0 0
    %365 = vmatprep.subr.bf16.mxu0 0
    %366 = vmatpush1.bf16.msra.mxu0 0
    %367 = vmatprep.subr.bf16.mxu0 0
    %368 = vmatpush1.bf16.msra.mxu0 0
    %369 = vmatprep.subr.bf16.mxu0 0
    %370 = vmatpush1.bf16.msra.mxu0 0
    %371 = vmatprep.subr.bf16.mxu0 0
    %372 = vmatpush1.bf16.msra.mxu0 0
    %373 = vmatprep.mubr.bf16.mxu0 %v339
    %374 = vmatmul.mubr.bf16.gmra.mrb[0].mxu0 %v336
    %v375 = vpop.f32.mrb[0].mxu0
    %v376 = vadd.f32 0.0, %v375
    %v377 = vpop.f32.mrb[0].mxu0
    %v378 = vadd.f32 0.0, %v377
    %v379 = vpop.f32.mrb[0].mxu0
    %v380 = vadd.f32 0.0, %v379
    %v381 = vpop.f32.mrb[0].mxu0
    %v382 = vadd.f32 0.0, %v381
    %383 = vdwg.mxu0
    %388 = vrot.lane.b32.xlu0 %v376, 56
    %v389 = vpop.permute.xlu0 %388
    %390 = vrot.lane.b32.xlu0 %v378, 56
    %v391 = vpop.permute.xlu0 %390
    %392 = vrot.lane.b32.xlu0 %v380, 56
    %v393 = vpop.permute.xlu0 %392
    %394 = vrot.lane.b32.xlu0 %v382, 56
    %v395 = vpop.permute.xlu0 %394
    %v396 = vsel %vm313, %v389, %v391
    %v397 = vsel %vm313, %v393, %v395
    %v400 = vmax.f32 %v376, %v396
    %v401 = vmax.f32 %v380, %v397
    %v402 = vmax.f32 %v400, %v401
    %v403 = vadd.f32 %v402, %v325
    %v404 = vmax.f32 %v403, 0.0
    %v405 = vld [vmem:[%s0 + $0x8] sm:$0xff]
    %v406 = vld [vmem:[%s0 + $0x10] sm:$0xff]
    %409 = vrot.lane.b32.xlu0 %v405, 100
    %v410 = vpop.permute.xlu0 %409
    %411 = vrot.lane.b32.xlu0 %v406, 100
    %v412 = vpop.permute.xlu0 %411
    %v413 = vsel %vm153, %v410, %v412
    %v416 = vpack.c.bf16 %v410, %v145
    %v417 = vpack.c.bf16 %v413, %v146
    %420 = vrot.lane.b32.xlu0 %v416, 16
    %v421 = vpop.permute.xlu0 %420
    %422 = vrot.lane.b32.xlu0 %v417, 16
    %v423 = vpop.permute.xlu0 %422
    %vm424 = vcmask 130048
    %v425 = vsel %vm424, %v421, %v423
    %v428 = vsel %vm247, %v423, 0
    %430 = vmatprep.subr.bf16.mxu0 %v214
    %431 = vmatpush1.bf16.msra.mxu0 %v213
    %432 = vmatprep.subr.bf16.mxu0 %v216
    %433 = vmatpush1.bf16.msra.mxu0 %v215
    %434 = vmatprep.subr.bf16.mxu0 %v218
    %435 = vmatpush1.bf16.msra.mxu0 %v217
    %436 = vmatprep.subr.bf16.mxu0 %v220
    %437 = vmatpush1.bf16.msra.mxu0 %v219
    %438 = vmatprep.subr.bf16.mxu0 %v222
    %439 = vmatpush1.bf16.msra.mxu0 %v221
    %440 = vmatprep.subr.bf16.mxu0 %v224
    %441 = vmatpush1.bf16.msra.mxu0 %v223
    %442 = vmatprep.subr.bf16.mxu0 %v226
    %443 = vmatpush1.bf16.msra.mxu0 %v225
    %444 = vmatprep.subr.bf16.mxu0 %v228
    %445 = vmatpush1.bf16.msra.mxu0 %v227
    %446 = vmatprep.subr.bf16.mxu0 %v256
    %447 = vmatpush1.bf16.msra.mxu0 %v253
    %448 = vmatprep.subr.bf16.mxu0 0
    %449 = vmatpush1.bf16.msra.mxu0 0
    %450 = vmatprep.subr.bf16.mxu0 0
    %451 = vmatpush1.bf16.msra.mxu0 0
    %452 = vmatprep.subr.bf16.mxu0 0
    %453 = vmatpush1.bf16.msra.mxu0 0
    %454 = vmatprep.subr.bf16.mxu0 0
    %455 = vmatpush1.bf16.msra.mxu0 0
    %456 = vmatprep.subr.bf16.mxu0 0
    %457 = vmatpush1.bf16.msra.mxu0 0
    %458 = vmatprep.subr.bf16.mxu0 0
    %459 = vmatpush1.bf16.msra.mxu0 0
    %460 = vmatprep.subr.bf16.mxu0 0
    %461 = vmatpush1.bf16.msra.mxu0 0
    %462 = vmatprep.mubr.bf16.mxu0 %v428
    %463 = vmatmul.mubr.bf16.gmra.mrb[0].mxu0 %v425
    %v464 = vpop.f32.mrb[0].mxu0
    %v465 = vadd.f32 0.0, %v464
    %v466 = vpop.f32.mrb[0].mxu0
    %v467 = vadd.f32 0.0, %v466
    %v468 = vpop.f32.mrb[0].mxu0
    %v469 = vadd.f32 0.0, %v468
    %v470 = vpop.f32.mrb[0].mxu0
    %v471 = vadd.f32 0.0, %v470
    %472 = vdwg.mxu0
    %477 = vrot.lane.b32.xlu0 %v465, 56
    %v478 = vpop.permute.xlu0 %477
    %479 = vrot.lane.b32.xlu0 %v467, 56
    %v480 = vpop.permute.xlu0 %479
    %481 = vrot.lane.b32.xlu0 %v469, 56
    %v482 = vpop.permute.xlu0 %481
    %483 = vrot.lane.b32.xlu0 %v471, 56
    %v484 = vpop.permute.xlu0 %483
    %v485 = vsel %vm313, %v478, %v480
    %v486 = vsel %vm313, %v482, %v484
    %v489 = vmax.f32 %v465, %v485
    %v490 = vmax.f32 %v469, %v486
    %v491 = vmax.f32 %v489, %v490
    %v492 = vadd.f32 %v491, %v325
    %v493 = vmax.f32 %v492, 0.0
    %v495 = vpack.c.bf16 %v413, %v405
    %v496 = vpack.c.bf16 %v412, %v406
    %499 = vrot.lane.b32.xlu0 %v495, 88
    %v500 = vpop.permute.xlu0 %499
    %501 = vrot.lane.b32.xlu0 %v496, 88
    %v502 = vpop.permute.xlu0 %501
    %vm503 = vcmask 719872
    %v504 = vsel %vm503, %v500, %v502
    %v507 = vsel %vm247, %v502, 0
    %509 = vmatprep.subr.bf16.mxu0 %v214
    %510 = vmatpush1.bf16.msra.mxu0 %v213
    %511 = vmatprep.subr.bf16.mxu0 %v216
    %512 = vmatpush1.bf16.msra.mxu0 %v215
    %513 = vmatprep.subr.bf16.mxu0 %v218
    %514 = vmatpush1.bf16.msra.mxu0 %v217
    %515 = vmatprep.subr.bf16.mxu0 %v220
    %516 = vmatpush1.bf16.msra.mxu0 %v219
    %517 = vmatprep.subr.bf16.mxu0 %v222
    %518 = vmatpush1.bf16.msra.mxu0 %v221
    %519 = vmatprep.subr.bf16.mxu0 %v224
    %520 = vmatpush1.bf16.msra.mxu0 %v223
    %521 = vmatprep.subr.bf16.mxu0 %v226
    %522 = vmatpush1.bf16.msra.mxu0 %v225
    %523 = vmatprep.subr.bf16.mxu0 %v228
    %524 = vmatpush1.bf16.msra.mxu0 %v227
    %525 = vmatprep.subr.bf16.mxu0 %v256
    %526 = vmatpush1.bf16.msra.mxu0 %v253
    %527 = vmatprep.subr.bf16.mxu0 0
    %528 = vmatpush1.bf16.msra.mxu0 0
    %529 = vmatprep.subr.bf16.mxu0 0
    %530 = vmatpush1.bf16.msra.mxu0 0
    %531 = vmatprep.subr.bf16.mxu0 0
    %532 = vmatpush1.bf16.msra.mxu0 0
    %533 = vmatprep.subr.bf16.mxu0 0
    %534 = vmatpush1.bf16.msra.mxu0 0
    %535 = vmatprep.subr.bf16.mxu0 0
    %536 = vmatpush1.bf16.msra.mxu0 0
    %537 = vmatprep.subr.bf16.mxu0 0
    %538 = vmatpush1.bf16.msra.mxu0 0
    %539 = vmatprep.subr.bf16.mxu0 0
    %540 = vmatpush1.bf16.msra.mxu0 0
    %541 = vmatprep.mubr.bf16.mxu0 %v507
    %542 = vmatmul.mubr.bf16.gmra.mrb[0].mxu0 %v504
    %v543 = vpop.f32.mrb[0].mxu0
    %v544 = vadd.f32 0.0, %v543
    %v545 = vpop.f32.mrb[0].mxu0
    %v546 = vadd.f32 0.0, %v545
    %v547 = vpop.f32.mrb[0].mxu0
    %v548 = vadd.f32 0.0, %v547
    %v549 = vpop.f32.mrb[0].mxu0
    %v550 = vadd.f32 0.0, %v549
    %551 = vdwg.mxu0
    %556 = vrot.lane.b32.xlu0 %v544, 56
    %v557 = vpop.permute.xlu0 %556
    %558 = vrot.lane.b32.xlu0 %v546, 56
    %v559 = vpop.permute.xlu0 %558
    %560 = vrot.lane.b32.xlu0 %v548, 56
    %v561 = vpop.permute.xlu0 %560
    %562 = vrot.lane.b32.xlu0 %v550, 56
    %v563 = vpop.permute.xlu0 %562
    %v564 = vsel %vm313, %v557, %v559
    %v565 = vsel %vm313, %v561, %v563
    %v568 = vmax.f32 %v544, %v564
    %v569 = vmax.f32 %v548, %v565
    %v570 = vmax.f32 %v568, %v569
    %v571 = vadd.f32 %v570, %v325
    %v572 = vmax.f32 %v571, 0.0
    %v573 = vld [vmem:[%s0 + $0x8] sm:$0xff]
    %v574 = vld [vmem:[%s0 + $0x10] sm:$0xff]
    %v575 = vld [vmem:[%s0 + $0x18] sm:$0xff]
    %579 = vrot.lane.b32.xlu0 %v573, 100
    %v580 = vpop.permute.xlu0 %579
    %581 = vrot.lane.b32.xlu0 %v574, 100
    %v582 = vpop.permute.xlu0 %581
    %583 = vrot.lane.b32.xlu0 %v575, 100
    %v584 = vpop.permute.xlu0 %583
    %v585 = vsel %vm153, %v580, %v582
    %v586 = vsel %vm153, %v582, %v584
    %v589 = vpack.c.bf16 %v585, %v405
    %v590 = vpack.c.bf16 %v586, %v406
    %593 = vrot.lane.b32.xlu0 %v589, 32
    %v594 = vpop.permute.xlu0 %593
    %595 = vrot.lane.b32.xlu0 %v590, 32
    %v596 = vpop.permute.xlu0 %595
    %vm597 = vcmask 261120
    %v598 = vsel %vm597, %v594, %v596
    %v601 = vsel %vm247, %v596, 0
    %603 = vmatprep.subr.bf16.mxu0 %v214
    %604 = vmatpush1.bf16.msra.mxu0 %v213
    %605 = vmatprep.subr.bf16.mxu0 %v216
    %606 = vmatpush1.bf16.msra.mxu0 %v215
    %607 = vmatprep.subr.bf16.mxu0 %v218
    %608 = vmatpush1.bf16.msra.mxu0 %v217
    %609 = vmatprep.subr.bf16.mxu0 %v220
    %610 = vmatpush1.bf16.msra.mxu0 %v219
    %611 = vmatprep.subr.bf16.mxu0 %v222
    %612 = vmatpush1.bf16.msra.mxu0 %v221
    %613 = vmatprep.subr.bf16.mxu0 %v224
    %614 = vmatpush1.bf16.msra.mxu0 %v223
    %615 = vmatprep.subr.bf16.mxu0 %v226
    %616 = vmatpush1.bf16.msra.mxu0 %v225
    %617 = vmatprep.subr.bf16.mxu0 %v228
    %618 = vmatpush1.bf16.msra.mxu0 %v227
    %619 = vmatprep.subr.bf16.mxu0 %v256
    %620 = vmatpush1.bf16.msra.mxu0 %v253
    %621 = vmatprep.subr.bf16.mxu0 0
    %622 = vmatpush1.bf16.msra.mxu0 0
    %623 = vmatprep.subr.bf16.mxu0 0
    %624 = vmatpush1.bf16.msra.mxu0 0
    %625 = vmatprep.subr.bf16.mxu0 0
    %626 = vmatpush1.bf16.msra.mxu0 0
    %627 = vmatprep.subr.bf16.mxu0 0
    %628 = vmatpush1.bf16.msra.mxu0 0
    %629 = vmatprep.subr.bf16.mxu0 0
    %630 = vmatpush1.bf16.msra.mxu0 0
    %631 = vmatprep.subr.bf16.mxu0 0
    %632 = vmatpush1.bf16.msra.mxu0 0
    %633 = vmatprep.subr.bf16.mxu0 0
    %634 = vmatpush1.bf16.msra.mxu0 0
    %635 = vmatprep.mubr.bf16.mxu0 %v601
    %636 = vmatmul.mubr.bf16.gmra.mrb[0].mxu0 %v598
    %v637 = vpop.f32.mrb[0].mxu0
    %v638 = vadd.f32 0.0, %v637
    %v639 = vpop.f32.mrb[0].mxu0
    %v640 = vadd.f32 0.0, %v639
    %v641 = vpop.f32.mrb[0].mxu0
    %v642 = vadd.f32 0.0, %v641
    %v643 = vpop.f32.mrb[0].mxu0
    %v644 = vadd.f32 0.0, %v643
    %645 = vdwg.mxu0
    %650 = vrot.lane.b32.xlu0 %v638, 56
    %v651 = vpop.permute.xlu0 %650
    %652 = vrot.lane.b32.xlu0 %v640, 56
    %v653 = vpop.permute.xlu0 %652
    %654 = vrot.lane.b32.xlu0 %v642, 56
    %v655 = vpop.permute.xlu0 %654
    %656 = vrot.lane.b32.xlu0 %v644, 56
    %v657 = vpop.permute.xlu0 %656
    %v658 = vsel %vm313, %v651, %v653
    %v659 = vsel %vm313, %v655, %v657
    %v662 = vmax.f32 %v638, %v658
    %v663 = vmax.f32 %v642, %v659
    %v664 = vmax.f32 %v662, %v663
    %v665 = vadd.f32 %v664, %v325
    %v666 = vmax.f32 %v665, 0.0
    %v668 = vpack.c.bf16 %v586, %v574
    %v669 = vpack.c.bf16 %v584, %v575
    %672 = vrot.lane.b32.xlu0 %v668, 104
    %v673 = vpop.permute.xlu0 %672
    %674 = vrot.lane.b32.xlu0 %v669, 104
    %v675 = vpop.permute.xlu0 %674
    %vm676 = vcmask 850944
    %v677 = vsel %vm676, %v673, %v675
    %v680 = vsel %vm247, %v675, 0
    %682 = vmatprep.subr.bf16.mxu0 %v214
    %683 = vmatpush1.bf16.msra.mxu0 %v213
    %684 = vmatprep.subr.bf16.mxu0 %v216
    %685 = vmatpush1.bf16.msra.mxu0 %v215
    %686 = vmatprep.subr.bf16.mxu0 %v218
    %687 = vmatpush1.bf16.msra.mxu0 %v217
    %688 = vmatprep.subr.bf16.mxu0 %v220
    %689 = vmatpush1.bf16.msra.mxu0 %v219
    %690 = vmatprep.subr.bf16.mxu0 %v222
    %691 = vmatpush1.bf16.msra.mxu0 %v221
    %692 = vmatprep.subr.bf16.mxu0 %v224
    %693 = vmatpush1.bf16.msra.mxu0 %v223
    %694 = vmatprep.subr.bf16.mxu0 %v226
    %695 = vmatpush1.bf16.msra.mxu0 %v225
    %696 = vmatprep.subr.bf16.mxu0 %v228
    %697 = vmatpush1.bf16.msra.mxu0 %v227
    %698 = vmatprep.subr.bf16.mxu0 %v256
    %699 = vmatpush1.bf16.msra.mxu0 %v253
    %700 = vmatprep.subr.bf16.mxu0 0
    %701 = vmatpush1.bf16.msra.mxu0 0
    %702 = vmatprep.subr.bf16.mxu0 0
    %703 = vmatpush1.bf16.msra.mxu0 0
    %704 = vmatprep.subr.bf16.mxu0 0
    %705 = vmatpush1.bf16.msra.mxu0 0
    %706 = vmatprep.subr.bf16.mxu0 0
    %707 = vmatpush1.bf16.msra.mxu0 0
    %708 = vmatprep.subr.bf16.mxu0 0
    %709 = vmatpush1.bf16.msra.mxu0 0
    %710 = vmatprep.subr.bf16.mxu0 0
    %711 = vmatpush1.bf16.msra.mxu0 0
    %712 = vmatprep.subr.bf16.mxu0 0
    %713 = vmatpush1.bf16.msra.mxu0 0
    %714 = vmatprep.mubr.bf16.mxu0 %v680
    %715 = vmatmul.mubr.bf16.gmra.mrb[0].mxu0 %v677
    %v716 = vpop.f32.mrb[0].mxu0
    %v717 = vadd.f32 0.0, %v716
    %v718 = vpop.f32.mrb[0].mxu0
    %v719 = vadd.f32 0.0, %v718
    %v720 = vpop.f32.mrb[0].mxu0
    %v721 = vadd.f32 0.0, %v720
    %v722 = vpop.f32.mrb[0].mxu0
    %v723 = vadd.f32 0.0, %v722
    %724 = vdwg.mxu0
    %729 = vrot.lane.b32.xlu0 %v717, 56
    %v730 = vpop.permute.xlu0 %729
    %731 = vrot.lane.b32.xlu0 %v719, 56
    %v732 = vpop.permute.xlu0 %731
    %733 = vrot.lane.b32.xlu0 %v721, 56
    %v734 = vpop.permute.xlu0 %733
    %735 = vrot.lane.b32.xlu0 %v723, 56
    %v736 = vpop.permute.xlu0 %735
    %v737 = vsel %vm313, %v730, %v732
    %v738 = vsel %vm313, %v734, %v736
    %v741 = vmax.f32 %v717, %v737
    %v742 = vmax.f32 %v721, %v738
    %v743 = vmax.f32 %v741, %v742
    %v744 = vadd.f32 %v743, %v325
    %v745 = vmax.f32 %v744, 0.0
    %746 = vrot.lane.b32.xlu0 %v668, 48
    %v747 = vpop.permute.xlu0 %746
    %748 = vrot.lane.b32.xlu0 %v669, 48
    %v749 = vpop.permute.xlu0 %748
    %vm750 = vcmask 392192
    %v751 = vsel %vm750, %v747, %v749
    %v754 = vsel %vm247, %v749, 0
    %756 = vmatprep.subr.bf16.mxu0 %v214
    %757 = vmatpush1.bf16.msra.mxu0 %v213
    %758 = vmatprep.subr.bf16.mxu0 %v216
    %759 = vmatpush1.bf16.msra.mxu0 %v215
    %760 = vmatprep.subr.bf16.mxu0 %v218
    %761 = vmatpush1.bf16.msra.mxu0 %v217
    %762 = vmatprep.subr.bf16.mxu0 %v220
    %763 = vmatpush1.bf16.msra.mxu0 %v219
    %764 = vmatprep.subr.bf16.mxu0 %v222
    %765 = vmatpush1.bf16.msra.mxu0 %v221
    %766 = vmatprep.subr.bf16.mxu0 %v224
    %767 = vmatpush1.bf16.msra.mxu0 %v223
    %768 = vmatprep.subr.bf16.mxu0 %v226
    %769 = vmatpush1.bf16.msra.mxu0 %v225
    %770 = vmatprep.subr.bf16.mxu0 %v228
    %771 = vmatpush1.bf16.msra.mxu0 %v227
    %772 = vmatprep.subr.bf16.mxu0 %v256
    %773 = vmatpush1.bf16.msra.mxu0 %v253
    %774 = vmatprep.subr.bf16.mxu0 0
    %775 = vmatpush1.bf16.msra.mxu0 0
    %776 = vmatprep.subr.bf16.mxu0 0
    %777 = vmatpush1.bf16.msra.mxu0 0
    %778 = vmatprep.subr.bf16.mxu0 0
    %779 = vmatpush1.bf16.msra.mxu0 0
    %780 = vmatprep.subr.bf16.mxu0 0
    %781 = vmatpush1.bf16.msra.mxu0 0
    %782 = vmatprep.subr.bf16.mxu0 0
    %783 = vmatpush1.bf16.msra.mxu0 0
    %784 = vmatprep.subr.bf16.mxu0 0
    %785 = vmatpush1.bf16.msra.mxu0 0
    %786 = vmatprep.subr.bf16.mxu0 0
    %787 = vmatpush1.bf16.msra.mxu0 0
    %788 = vmatprep.mubr.bf16.mxu0 %v754
    %789 = vmatmul.mubr.bf16.gmra.mrb[0].mxu0 %v751
    %v790 = vpop.f32.mrb[0].mxu0
    %v791 = vadd.f32 0.0, %v790
    %v792 = vpop.f32.mrb[0].mxu0
    %v793 = vadd.f32 0.0, %v792
    %v794 = vpop.f32.mrb[0].mxu0
    %v795 = vadd.f32 0.0, %v794
    %v796 = vpop.f32.mrb[0].mxu0
    %v797 = vadd.f32 0.0, %v796
    %798 = vdwg.mxu0
    %803 = vrot.lane.b32.xlu0 %v791, 56
    %v804 = vpop.permute.xlu0 %803
    %805 = vrot.lane.b32.xlu0 %v793, 56
    %v806 = vpop.permute.xlu0 %805
    %807 = vrot.lane.b32.xlu0 %v795, 56
    %v808 = vpop.permute.xlu0 %807
    %809 = vrot.lane.b32.xlu0 %v797, 56
    %v810 = vpop.permute.xlu0 %809
    %v811 = vsel %vm313, %v804, %v806
    %v812 = vsel %vm313, %v808, %v810
    %v815 = vmax.f32 %v791, %v811
    %v816 = vmax.f32 %v795, %v812
    %v817 = vmax.f32 %v815, %v816
    %v818 = vadd.f32 %v817, %v325
    %v819 = vmax.f32 %v818, 0.0
    %v820 = vld [vmem:[%s0 + $0x18] sm:$0xff]
    %v821 = vld [vmem:[%s0 + $0x20] sm:$0xff]
    %824 = vrot.lane.b32.xlu0 %v820, 100
    %v825 = vpop.permute.xlu0 %824
    %826 = vrot.lane.b32.xlu0 %v821, 100
    %v827 = vpop.permute.xlu0 %826
    %v828 = vsel %vm153, %v825, %v827
    %v831 = vpack.c.bf16 %v828, %v820
    %v832 = vpack.c.bf16 %v827, %v821
    %835 = vrot.lane.b32.xlu0 %v831, 120
    %v836 = vpop.permute.xlu0 %835
    %837 = vrot.lane.b32.xlu0 %v832, 120
    %v838 = vpop.permute.xlu0 %837
    %vm839 = vcmask 982016
    %v840 = vsel %vm839, %v836, %v838
    %v843 = vsel %vm247, %v838, 0
    %845 = vmatprep.subr.bf16.mxu0 %v214
    %846 = vmatpush1.bf16.msra.mxu0 %v213
    %847 = vmatprep.subr.bf16.mxu0 %v216
    %848 = vmatpush1.bf16.msra.mxu0 %v215
    %849 = vmatprep.subr.bf16.mxu0 %v218
    %850 = vmatpush1.bf16.msra.mxu0 %v217
    %851 = vmatprep.subr.bf16.mxu0 %v220
    %852 = vmatpush1.bf16.msra.mxu0 %v219
    %853 = vmatprep.subr.bf16.mxu0 %v222
    %854 = vmatpush1.bf16.msra.mxu0 %v221
    %855 = vmatprep.subr.bf16.mxu0 %v224
    %856 = vmatpush1.bf16.msra.mxu0 %v223
    %857 = vmatprep.subr.bf16.mxu0 %v226
    %858 = vmatpush1.bf16.msra.mxu0 %v225
    %859 = vmatprep.subr.bf16.mxu0 %v228
    %860 = vmatpush1.bf16.msra.mxu0 %v227
    %861 = vmatprep.subr.bf16.mxu0 %v256
    %862 = vmatpush1.bf16.msra.mxu0 %v253
    %863 = vmatprep.subr.bf16.mxu0 0
    %864 = vmatpush1.bf16.msra.mxu0 0
    %865 = vmatprep.subr.bf16.mxu0 0
    %866 = vmatpush1.bf16.msra.mxu0 0
    %867 = vmatprep.subr.bf16.mxu0 0
    %868 = vmatpush1.bf16.msra.mxu0 0
    %869 = vmatprep.subr.bf16.mxu0 0
    %870 = vmatpush1.bf16.msra.mxu0 0
    %871 = vmatprep.subr.bf16.mxu0 0
    %872 = vmatpush1.bf16.msra.mxu0 0
    %873 = vmatprep.subr.bf16.mxu0 0
    %874 = vmatpush1.bf16.msra.mxu0 0
    %875 = vmatprep.subr.bf16.mxu0 0
    %876 = vmatpush1.bf16.msra.mxu0 0
    %877 = vmatprep.mubr.bf16.mxu0 %v843
    %878 = vmatmul.mubr.bf16.gmra.mrb[0].mxu0 %v840
    %v879 = vpop.f32.mrb[0].mxu0
    %v880 = vadd.f32 0.0, %v879
    %v881 = vpop.f32.mrb[0].mxu0
    %v882 = vadd.f32 0.0, %v881
    %v883 = vpop.f32.mrb[0].mxu0
    %v884 = vadd.f32 0.0, %v883
    %v885 = vpop.f32.mrb[0].mxu0
    %v886 = vadd.f32 0.0, %v885
    %887 = vdwg.mxu0
    %892 = vrot.lane.b32.xlu0 %v880, 56
    %v893 = vpop.permute.xlu0 %892
    %894 = vrot.lane.b32.xlu0 %v882, 56
    %v895 = vpop.permute.xlu0 %894
    %896 = vrot.lane.b32.xlu0 %v884, 56
    %v897 = vpop.permute.xlu0 %896
    %898 = vrot.lane.b32.xlu0 %v886, 56
    %v899 = vpop.permute.xlu0 %898
    %v900 = vsel %vm313, %v893, %v895
    %v901 = vsel %vm313, %v897, %v899
    %v904 = vmax.f32 %v880, %v900
    %v905 = vmax.f32 %v884, %v901
    %v906 = vmax.f32 %v904, %v905
    %v907 = vadd.f32 %v906, %v325
    %v908 = vmax.f32 %v907, 0.0
    %909 = vrot.lane.b32.xlu0 %v831, 64
    %v910 = vpop.permute.xlu0 %909
    %911 = vrot.lane.b32.xlu0 %v832, 64
    %v912 = vpop.permute.xlu0 %911
    %vm913 = vcmask 523264
    %v914 = vsel %vm913, %v910, %v912
    %v917 = vsel %vm247, %v912, 0
    %919 = vmatprep.subr.bf16.mxu0 %v214
    %920 = vmatpush1.bf16.msra.mxu0 %v213
    %921 = vmatprep.subr.bf16.mxu0 %v216
    %922 = vmatpush1.bf16.msra.mxu0 %v215
    %923 = vmatprep.subr.bf16.mxu0 %v218
    %924 = vmatpush1.bf16.msra.mxu0 %v217
    %925 = vmatprep.subr.bf16.mxu0 %v220
    %926 = vmatpush1.bf16.msra.mxu0 %v219
    %927 = vmatprep.subr.bf16.mxu0 %v222
    %928 = vmatpush1.bf16.msra.mxu0 %v221
    %929 = vmatprep.subr.bf16.mxu0 %v224
    %930 = vmatpush1.bf16.msra.mxu0 %v223
    %931 = vmatprep.subr.bf16.mxu0 %v226
    %932 = vmatpush1.bf16.msra.mxu0 %v225
    %933 = vmatprep.subr.bf16.mxu0 %v228
    %934 = vmatpush1.bf16.msra.mxu0 %v227
    %935 = vmatprep.subr.bf16.mxu0 %v256
    %936 = vmatpush1.bf16.msra.mxu0 %v253
    %937 = vmatprep.subr.bf16.mxu0 0
    %938 = vmatpush1.bf16.msra.mxu0 0
    %939 = vmatprep.subr.bf16.mxu0 0
    %940 = vmatpush1.bf16.msra.mxu0 0
    %941 = vmatprep.subr.bf16.mxu0 0
    %942 = vmatpush1.bf16.msra.mxu0 0
    %943 = vmatprep.subr.bf16.mxu0 0
    %944 = vmatpush1.bf16.msra.mxu0 0
    %945 = vmatprep.subr.bf16.mxu0 0
    %946 = vmatpush1.bf16.msra.mxu0 0
    %947 = vmatprep.subr.bf16.mxu0 0
    %948 = vmatpush1.bf16.msra.mxu0 0
    %949 = vmatprep.subr.bf16.mxu0 0
    %950 = vmatpush1.bf16.msra.mxu0 0
    %951 = vmatprep.mubr.bf16.mxu0 %v917
    %952 = vmatmul.mubr.bf16.gmra.mrb[0].mxu0 %v914
    %v953 = vpop.f32.mrb[0].mxu0
    %v954 = vadd.f32 0.0, %v953
    %v955 = vpop.f32.mrb[0].mxu0
    %v956 = vadd.f32 0.0, %v955
    %v957 = vpop.f32.mrb[0].mxu0
    %v958 = vadd.f32 0.0, %v957
    %v959 = vpop.f32.mrb[0].mxu0
    %v960 = vadd.f32 0.0, %v959
    %961 = vdwg.mxu0
    %966 = vrot.lane.b32.xlu0 %v954, 56
    %v967 = vpop.permute.xlu0 %966
    %968 = vrot.lane.b32.xlu0 %v956, 56
    %v969 = vpop.permute.xlu0 %968
    %970 = vrot.lane.b32.xlu0 %v958, 56
    %v971 = vpop.permute.xlu0 %970
    %972 = vrot.lane.b32.xlu0 %v960, 56
    %v973 = vpop.permute.xlu0 %972
    %v974 = vsel %vm313, %v967, %v969
    %v975 = vsel %vm313, %v971, %v973
    %v978 = vmax.f32 %v954, %v974
    %v979 = vmax.f32 %v958, %v975
    %v980 = vmax.f32 %v978, %v979
    %v981 = vadd.f32 %v980, %v325
    %v982 = vmax.f32 %v981, 0.0
    %v983 = vld [vmem:[%s0 + $0x18] sm:$0xff]
    %v984 = vld [vmem:[%s0 + $0x20] sm:$0xff]
    %v985 = vld [vmem:[%s0 + $0x28] sm:$0xff]
    %988 = vrot.lane.b32.xlu0 %v984, 100
    %v989 = vpop.permute.xlu0 %988
    %990 = vrot.lane.b32.xlu0 %v985, 100
    %v991 = vpop.permute.xlu0 %990
    %v992 = vsel %vm153, %v989, %v991
    %v996 = vpack.c.bf16 %v989, %v983
    %v997 = vpack.c.bf16 %v992, %v984
    %v998 = vpack.c.bf16 %v991, %v985
    %1002 = vrot.lane.b32.xlu0 %v996, 8
    %v1003 = vpop.permute.xlu0 %1002
    %1004 = vrot.lane.b32.xlu0 %v997, 8
    %v1005 = vpop.permute.xlu0 %1004
    %1006 = vrot.lane.b32.xlu0 %v998, 8
    %v1007 = vpop.permute.xlu0 %1006
    %vm1008 = vcmask 64512
    %v1009 = vsel %vm1008, %v1003, %v1005
    %v1010 = vsel %vm1008, %v1005, %v1007
    %v1013 = vsel %vm247, %v1010, 0
    %1015 = vmatprep.subr.bf16.mxu0 %v214
    %1016 = vmatpush1.bf16.msra.mxu0 %v213
    %1017 = vmatprep.subr.bf16.mxu0 %v216
    %1018 = vmatpush1.bf16.msra.mxu0 %v215
    %1019 = vmatprep.subr.bf16.mxu0 %v218
    %1020 = vmatpush1.bf16.msra.mxu0 %v217
    %1021 = vmatprep.subr.bf16.mxu0 %v220
    %1022 = vmatpush1.bf16.msra.mxu0 %v219
    %1023 = vmatprep.subr.bf16.mxu0 %v222
    %1024 = vmatpush1.bf16.msra.mxu0 %v221
    %1025 = vmatprep.subr.bf16.mxu0 %v224
    %1026 = vmatpush1.bf16.msra.mxu0 %v223
    %1027 = vmatprep.subr.bf16.mxu0 %v226
    %1028 = vmatpush1.bf16.msra.mxu0 %v225
    %1029 = vmatprep.subr.bf16.mxu0 %v228
    %1030 = vmatpush1.bf16.msra.mxu0 %v227
    %1031 = vmatprep.subr.bf16.mxu0 %v256
    %1032 = vmatpush1.bf16.msra.mxu0 %v253
    %1033 = vmatprep.subr.bf16.mxu0 0
    %1034 = vmatpush1.bf16.msra.mxu0 0
    %1035 = vmatprep.subr.bf16.mxu0 0
    %1036 = vmatpush1.bf16.msra.mxu0 0
    %1037 = vmatprep.subr.bf16.mxu0 0
    %1038 = vmatpush1.bf16.msra.mxu0 0
    %1039 = vmatprep.subr.bf16.mxu0 0
    %1040 = vmatpush1.bf16.msra.mxu0 0
    %1041 = vmatprep.subr.bf16.mxu0 0
    %1042 = vmatpush1.bf16.msra.mxu0 0
    %1043 = vmatprep.subr.bf16.mxu0 0
    %1044 = vmatpush1.bf16.msra.mxu0 0
    %1045 = vmatprep.subr.bf16.mxu0 0
    %1046 = vmatpush1.bf16.msra.mxu0 0
    %1047 = vmatprep.mubr.bf16.mxu0 %v1013
    %1048 = vmatmul.mubr.bf16.gmra.mrb[0].mxu0 %v1009
    %v1049 = vpop.f32.mrb[0].mxu0
    %v1050 = vadd.f32 0.0, %v1049
    %v1051 = vpop.f32.mrb[0].mxu0
    %v1052 = vadd.f32 0.0, %v1051
    %v1053 = vpop.f32.mrb[0].mxu0
    %v1054 = vadd.f32 0.0, %v1053
    %v1055 = vpop.f32.mrb[0].mxu0
    %v1056 = vadd.f32 0.0, %v1055
    %1057 = vdwg.mxu0
    %1062 = vrot.lane.b32.xlu0 %v1050, 56
    %v1063 = vpop.permute.xlu0 %1062
    %1064 = vrot.lane.b32.xlu0 %v1052, 56
    %v1065 = vpop.permute.xlu0 %1064
    %1066 = vrot.lane.b32.xlu0 %v1054, 56
    %v1067 = vpop.permute.xlu0 %1066
    %1068 = vrot.lane.b32.xlu0 %v1056, 56
    %v1069 = vpop.permute.xlu0 %1068
    %v1070 = vsel %vm313, %v1063, %v1065
    %v1071 = vsel %vm313, %v1067, %v1069
    %v1074 = vmax.f32 %v1050, %v1070
    %v1075 = vmax.f32 %v1054, %v1071
    %v1076 = vmax.f32 %v1074, %v1075
    %v1077 = vadd.f32 %v1076, %v325
    %v1078 = vmax.f32 %v1077, 0.0
    %1079 = vrot.lane.b32.xlu0 %v997, 80
    %v1080 = vpop.permute.xlu0 %1079
    %1081 = vrot.lane.b32.xlu0 %v998, 80
    %v1082 = vpop.permute.xlu0 %1081
    %vm1083 = vcmask 654336
    %v1084 = vsel %vm1083, %v1080, %v1082
    %v1087 = vsel %vm247, %v1082, 0
    %1089 = vmatprep.subr.bf16.mxu0 %v214
    %1090 = vmatpush1.bf16.msra.mxu0 %v213
    %1091 = vmatprep.subr.bf16.mxu0 %v216
    %1092 = vmatpush1.bf16.msra.mxu0 %v215
    %1093 = vmatprep.subr.bf16.mxu0 %v218
    %1094 = vmatpush1.bf16.msra.mxu0 %v217
    %1095 = vmatprep.subr.bf16.mxu0 %v220
    %1096 = vmatpush1.bf16.msra.mxu0 %v219
    %1097 = vmatprep.subr.bf16.mxu0 %v222
    %1098 = vmatpush1.bf16.msra.mxu0 %v221
    %1099 = vmatprep.subr.bf16.mxu0 %v224
    %1100 = vmatpush1.bf16.msra.mxu0 %v223
    %1101 = vmatprep.subr.bf16.mxu0 %v226
    %1102 = vmatpush1.bf16.msra.mxu0 %v225
    %1103 = vmatprep.subr.bf16.mxu0 %v228
    %1104 = vmatpush1.bf16.msra.mxu0 %v227
    %1105 = vmatprep.subr.bf16.mxu0 %v256
    %1106 = vmatpush1.bf16.msra.mxu0 %v253
    %1107 = vmatprep.subr.bf16.mxu0 0
    %1108 = vmatpush1.bf16.msra.mxu0 0
    %1109 = vmatprep.subr.bf16.mxu0 0
    %1110 = vmatpush1.bf16.msra.mxu0 0
    %1111 = vmatprep.subr.bf16.mxu0 0
    %1112 = vmatpush1.bf16.msra.mxu0 0
    %1113 = vmatprep.subr.bf16.mxu0 0
    %1114 = vmatpush1.bf16.msra.mxu0 0
    %1115 = vmatprep.subr.bf16.mxu0 0
    %1116 = vmatpush1.bf16.msra.mxu0 0
    %1117 = vmatprep.subr.bf16.mxu0 0
    %1118 = vmatpush1.bf16.msra.mxu0 0
    %1119 = vmatprep.subr.bf16.mxu0 0
    %1120 = vmatpush1.bf16.msra.mxu0 0
    %1121 = vmatprep.mubr.bf16.mxu0 %v1087
    %1122 = vmatmul.mubr.bf16.gmra.mrb[0].mxu0 %v1084
    %v1123 = vpop.f32.mrb[0].mxu0
    %v1124 = vadd.f32 0.0, %v1123
    %v1125 = vpop.f32.mrb[0].mxu0
    %v1126 = vadd.f32 0.0, %v1125
    %v1127 = vpop.f32.mrb[0].mxu0
    %v1128 = vadd.f32 0.0, %v1127
    %v1129 = vpop.f32.mrb[0].mxu0
    %v1130 = vadd.f32 0.0, %v1129
    %1131 = vdwg.mxu0
    %1136 = vrot.lane.b32.xlu0 %v1124, 56
    %v1137 = vpop.permute.xlu0 %1136
    %1138 = vrot.lane.b32.xlu0 %v1126, 56
    %v1139 = vpop.permute.xlu0 %1138
    %1140 = vrot.lane.b32.xlu0 %v1128, 56
    %v1141 = vpop.permute.xlu0 %1140
    %1142 = vrot.lane.b32.xlu0 %v1130, 56
    %v1143 = vpop.permute.xlu0 %1142
    %v1144 = vsel %vm313, %v1137, %v1139
    %v1145 = vsel %vm313, %v1141, %v1143
    %v1148 = vmax.f32 %v1124, %v1144
    %v1149 = vmax.f32 %v1128, %v1145
    %v1150 = vmax.f32 %v1148, %v1149
    %v1151 = vadd.f32 %v1150, %v325
    %v1152 = vmax.f32 %v1151, 0.0
    %v1153 = vld [vmem:[%s0 + $0x28] sm:$0xff]
    %v1154 = vld [vmem:[%s0 + $0x30] sm:$0xff]
    %1157 = vrot.lane.b32.xlu0 %v1153, 100
    %v1158 = vpop.permute.xlu0 %1157
    %1159 = vrot.lane.b32.xlu0 %v1154, 100
    %v1160 = vpop.permute.xlu0 %1159
    %v1161 = vsel %vm153, %v1158, %v1160
    %v1164 = vpack.c.bf16 %v1158, %v984
    %v1165 = vpack.c.bf16 %v1161, %v985
    %1168 = vrot.lane.b32.xlu0 %v1164, 24
    %v1169 = vpop.permute.xlu0 %1168
    %1170 = vrot.lane.b32.xlu0 %v1165, 24
    %v1171 = vpop.permute.xlu0 %1170
    %vm1172 = vcmask 195584
    %v1173 = vsel %vm1172, %v1169, %v1171
    %v1176 = vsel %vm247, %v1171, 0
    %1178 = vmatprep.subr.bf16.mxu0 %v214
    %1179 = vmatpush1.bf16.msra.mxu0 %v213
    %1180 = vmatprep.subr.bf16.mxu0 %v216
    %1181 = vmatpush1.bf16.msra.mxu0 %v215
    %1182 = vmatprep.subr.bf16.mxu0 %v218
    %1183 = vmatpush1.bf16.msra.mxu0 %v217
    %1184 = vmatprep.subr.bf16.mxu0 %v220
    %1185 = vmatpush1.bf16.msra.mxu0 %v219
    %1186 = vmatprep.subr.bf16.mxu0 %v222
    %1187 = vmatpush1.bf16.msra.mxu0 %v221
    %1188 = vmatprep.subr.bf16.mxu0 %v224
    %1189 = vmatpush1.bf16.msra.mxu0 %v223
    %1190 = vmatprep.subr.bf16.mxu0 %v226
    %1191 = vmatpush1.bf16.msra.mxu0 %v225
    %1192 = vmatprep.subr.bf16.mxu0 %v228
    %1193 = vmatpush1.bf16.msra.mxu0 %v227
    %1194 = vmatprep.subr.bf16.mxu0 %v256
    %1195 = vmatpush1.bf16.msra.mxu0 %v253
    %1196 = vmatprep.subr.bf16.mxu0 0
    %1197 = vmatpush1.bf16.msra.mxu0 0
    %1198 = vmatprep.subr.bf16.mxu0 0
    %1199 = vmatpush1.bf16.msra.mxu0 0
    %1200 = vmatprep.subr.bf16.mxu0 0
    %1201 = vmatpush1.bf16.msra.mxu0 0
    %1202 = vmatprep.subr.bf16.mxu0 0
    %1203 = vmatpush1.bf16.msra.mxu0 0
    %1204 = vmatprep.subr.bf16.mxu0 0
    %1205 = vmatpush1.bf16.msra.mxu0 0
    %1206 = vmatprep.subr.bf16.mxu0 0
    %1207 = vmatpush1.bf16.msra.mxu0 0
    %1208 = vmatprep.subr.bf16.mxu0 0
    %1209 = vmatpush1.bf16.msra.mxu0 0
    %1210 = vmatprep.mubr.bf16.mxu0 %v1176
    %1211 = vmatmul.mubr.bf16.gmra.mrb[0].mxu0 %v1173
    %v1212 = vpop.f32.mrb[0].mxu0
    %v1213 = vadd.f32 0.0, %v1212
    %v1214 = vpop.f32.mrb[0].mxu0
    %v1215 = vadd.f32 0.0, %v1214
    %v1216 = vpop.f32.mrb[0].mxu0
    %v1217 = vadd.f32 0.0, %v1216
    %v1218 = vpop.f32.mrb[0].mxu0
    %v1219 = vadd.f32 0.0, %v1218
    %1220 = vdwg.mxu0
    %1225 = vrot.lane.b32.xlu0 %v1213, 56
    %v1226 = vpop.permute.xlu0 %1225
    %1227 = vrot.lane.b32.xlu0 %v1215, 56
    %v1228 = vpop.permute.xlu0 %1227
    %1229 = vrot.lane.b32.xlu0 %v1217, 56
    %v1230 = vpop.permute.xlu0 %1229
    %1231 = vrot.lane.b32.xlu0 %v1219, 56
    %v1232 = vpop.permute.xlu0 %1231
    %v1233 = vsel %vm313, %v1226, %v1228
    %v1234 = vsel %vm313, %v1230, %v1232
    %v1237 = vmax.f32 %v1213, %v1233
    %v1238 = vmax.f32 %v1217, %v1234
    %v1239 = vmax.f32 %v1237, %v1238
    %v1240 = vadd.f32 %v1239, %v325
    %v1241 = vmax.f32 %v1240, 0.0
    %1243 = vrot.lane.b32.xlu0 %v404, 72
    %v1244 = vpop.permute.xlu0 %1243
    %1247 = vrot.lane.b32.xlu0 %v493, 16
    %v1248 = vpop.permute.xlu0 %1247
    %1251 = vrot.lane.b32.xlu0 %v572, 88
    %v1252 = vpop.permute.xlu0 %1251
    %1255 = vrot.lane.b32.xlu0 %v666, 32
    %v1256 = vpop.permute.xlu0 %1255
    %vm1258 = vcmask 588800
    %v1259 = vsel %vm1258, %v328, %v1244
    %vm1260 = vcmask 130048
    %v1261 = vsel %vm1260, %v1244, %v1248
    %vm1262 = vcmask 719872
    %v1263 = vsel %vm1262, %v1261, %v1252
    %vm1264 = vcmask 261120
    %v1265 = vsel %vm1264, %v1252, %v1256
    %1266 = vrot.lane.b32.xlu0 %v493, 72
    %v1267 = vpop.permute.xlu0 %1266
    %1269 = vrot.lane.b32.xlu0 %v572, 16
    %v1270 = vpop.permute.xlu0 %1269
    %1272 = vrot.lane.b32.xlu0 %v666, 88
    %v1273 = vpop.permute.xlu0 %1272
    %1276 = vrot.lane.b32.xlu0 %v745, 32
    %v1277 = vpop.permute.xlu0 %1276
    %v1279 = vsel %vm1258, %v404, %v1267
    %v1280 = vsel %vm1260, %v1267, %v1270
    %v1281 = vsel %vm1262, %v1280, %v1273
    %v1282 = vsel %vm1264, %v1273, %v1277
    %v1283 = vpack.c.bf16 %v1279, %v1259
    %v1284 = vpack.c.bf16 %v1281, %v1263
    %v1285 = vpack.c.bf16 %v1282, %v1265
    %v1331 = vunpack.c.l.b16 %v98
    %v1332 = vunpack.c.l.b16 %v99
    %v1333 = vunpack.c.l.b16 %v100
    %v1334 = vunpack.c.l.b16 %v101
    %v1335 = vunpack.c.l.b16 %v102
    %v1336 = vunpack.c.l.b16 %v103
    %v1337 = vunpack.c.l.b16 %v104
    %v1338 = vunpack.c.l.b16 %v105
    %v1339 = vunpack.c.l.b16 %v106
    %v1340 = vunpack.c.l.b16 %v107
    %v1341 = vunpack.c.l.b16 %v108
    %v1342 = vunpack.c.l.b16 %v109
    %v1343 = vunpack.c.l.b16 %v110
    %v1344 = vunpack.c.l.b16 %v111
    %v1345 = vunpack.c.l.b16 %v112
    %v1346 = vunpack.c.l.b16 %v113
    %v1347 = vunpack.c.l.b16 %v114
    %v1348 = vunpack.c.l.b16 %v115
    %v1349 = vunpack.c.l.b16 %v116
    %v1350 = vunpack.c.l.b16 %v117
    %v1351 = vunpack.c.l.b16 %v118
    %v1352 = vunpack.c.l.b16 %v119
    %v1353 = vunpack.c.l.b16 %v120
    %v1354 = vunpack.c.l.b16 %v121
    %v1355 = vunpack.c.l.b16 %v122
    %v1356 = vunpack.c.l.b16 %v123
    %v1357 = vunpack.c.l.b16 %v124
    %v1358 = vunpack.c.l.b16 %v125
    %v1359 = vunpack.c.l.b16 %v126
    %v1360 = vunpack.c.l.b16 %v127
    %v1361 = vunpack.c.l.b16 %v128
    %v1362 = vunpack.c.l.b16 %v129
    %v1363 = vunpack.c.l.b16 %v130
    %v1364 = vunpack.c.l.b16 %v131
    %v1365 = vunpack.c.l.b16 %v132
    %v1366 = vunpack.c.l.b16 %v133
    %v1367 = vunpack.c.l.b16 %v134
    %v1368 = vunpack.c.l.b16 %v135
    %v1369 = vunpack.c.l.b16 %v136
    %v1370 = vunpack.c.l.b16 %v137
    %v1371 = vunpack.c.l.b16 %v138
    %v1372 = vunpack.c.l.b16 %v139
    %v1373 = vunpack.c.l.b16 %v140
    %v1374 = vunpack.c.l.b16 %v141
    %v1375 = vunpack.c.l.b16 %v142
    %v1376 = vpack.c.b16 %v1332, %v1331
    %v1377 = vpack.c.b16 %v1334, %v1333
    %v1378 = vpack.c.b16 %v1336, %v1335
    %v1379 = vpack.c.b16 %v1338, %v1337
    %v1380 = vpack.c.b16 %v1340, %v1339
    %v1381 = vpack.c.b16 %v1342, %v1341
    %v1382 = vpack.c.b16 %v1344, %v1343
    %v1383 = vpack.c.b16 %v1346, %v1345
    %v1384 = vpack.c.b16 %v1348, %v1347
    %v1385 = vpack.c.b16 %v1350, %v1349
    %v1386 = vpack.c.b16 %v1352, %v1351
    %v1387 = vpack.c.b16 %v1354, %v1353
    %v1388 = vpack.c.b16 %v1356, %v1355
    %v1389 = vpack.c.b16 %v1358, %v1357
    %v1390 = vpack.c.b16 %v1360, %v1359
    %v1391 = vpack.c.b16 %v1362, %v1361
    %v1392 = vpack.c.b16 %v1364, %v1363
    %v1393 = vpack.c.b16 %v1366, %v1365
    %v1394 = vpack.c.b16 %v1368, %v1367
    %v1395 = vpack.c.b16 %v1370, %v1369
    %v1396 = vpack.c.b16 %v1372, %v1371
    %v1397 = vpack.c.b16 %v1374, %v1373
    %v1398 = vpack.c.b16 %v1375, %v1375
    %vm1421 = vcmask 850944
    %v1423 = vsel %vm1421, %v1285, 0
    %vm1425 = vcmask 1043456
    %v1427 = vsel %vm1425, %v1398, 0
    %1429 = vmatprep.subr.bf16.mxu0 0
    %1430 = vmatpush1.bf16.msra.mxu0 %v1376
    %1431 = vmatprep.subr.bf16.mxu0 0
    %1432 = vmatpush1.bf16.msra.mxu0 %v1377
    %1433 = vmatprep.subr.bf16.mxu0 0
    %1434 = vmatpush1.bf16.msra.mxu0 %v1378
    %1435 = vmatprep.subr.bf16.mxu0 0
    %1436 = vmatpush1.bf16.msra.mxu0 %v1379
    %1437 = vmatprep.subr.bf16.mxu0 0
    %1438 = vmatpush1.bf16.msra.mxu0 %v1380
    %1439 = vmatprep.subr.bf16.mxu0 0
    %1440 = vmatpush1.bf16.msra.mxu0 %v1381
    %1441 = vmatprep.subr.bf16.mxu0 0
    %1442 = vmatpush1.bf16.msra.mxu0 %v1382
    %1443 = vmatprep.subr.bf16.mxu0 0
    %1444 = vmatpush1.bf16.msra.mxu0 %v1383
    %1445 = vmatprep.subr.bf16.mxu0 0
    %1446 = vmatpush1.bf16.msra.mxu0 %v1384
    %1447 = vmatprep.subr.bf16.mxu0 0
    %1448 = vmatpush1.bf16.msra.mxu0 %v1385
    %1449 = vmatprep.subr.bf16.mxu0 0
    %1450 = vmatpush1.bf16.msra.mxu0 %v1386
    %1451 = vmatprep.subr.bf16.mxu0 0
    %1452 = vmatpush1.bf16.msra.mxu0 %v1387
    %1453 = vmatprep.subr.bf16.mxu0 0
    %1454 = vmatpush1.bf16.msra.mxu0 %v1388
    %1455 = vmatprep.subr.bf16.mxu0 0
    %1456 = vmatpush1.bf16.msra.mxu0 %v1389
    %1457 = vmatprep.subr.bf16.mxu0 0
    %1458 = vmatpush1.bf16.msra.mxu0 %v1390
    %1459 = vmatprep.subr.bf16.mxu0 0
    %1460 = vmatpush1.bf16.msra.mxu0 %v1391
    %1461 = vmatprep.mubr.bf16.mxu0 %v1284
    %1462 = vmatmul.mubr.bf16.gmra.mrb[0].mxu0 %v1283
    %v1463 = vpop.f32.mrb[0].mxu0
    %v1464 = vadd.f32 0.0, %v1463
    %v1465 = vpop.f32.mrb[0].mxu0
    %v1466 = vpop.f32.mrb[0].mxu0
    %v1467 = vadd.f32 0.0, %v1466
    %v1468 = vpop.f32.mrb[0].mxu0
    %1469 = vdwg.mxu0
    %1470 = vmatprep.subr.bf16.mxu0 0
    %1471 = vmatpush1.bf16.msra.mxu0 %v1392
    %1472 = vmatprep.subr.bf16.mxu0 0
    %1473 = vmatpush1.bf16.msra.mxu0 %v1393
    %1474 = vmatprep.subr.bf16.mxu0 0
    %1475 = vmatpush1.bf16.msra.mxu0 %v1394
    %1476 = vmatprep.subr.bf16.mxu0 0
    %1477 = vmatpush1.bf16.msra.mxu0 %v1395
    %1478 = vmatprep.subr.bf16.mxu0 0
    %1479 = vmatpush1.bf16.msra.mxu0 %v1396
    %1480 = vmatprep.subr.bf16.mxu0 0
    %1481 = vmatpush1.bf16.msra.mxu0 %v1397
    %1482 = vmatprep.subr.bf16.mxu0 0
    %1483 = vmatpush1.bf16.msra.mxu0 %v1427
    %1484 = vmatprep.subr.bf16.mxu0 0
    %1485 = vmatpush1.bf16.msra.mxu0 0
    %1486 = vmatprep.subr.bf16.mxu0 0
    %1487 = vmatpush1.bf16.msra.mxu0 0
    %1488 = vmatprep.subr.bf16.mxu0 0
    %1489 = vmatpush1.bf16.msra.mxu0 0
    %1490 = vmatprep.subr.bf16.mxu0 0
    %1491 = vmatpush1.bf16.msra.mxu0 0
    %1492 = vmatprep.subr.bf16.mxu0 0
    %1493 = vmatpush1.bf16.msra.mxu0 0
    %1494 = vmatprep.subr.bf16.mxu0 0
    %1495 = vmatpush1.bf16.msra.mxu0 0
    %1496 = vmatprep.subr.bf16.mxu0 0
    %1497 = vmatpush1.bf16.msra.mxu0 0
    %1498 = vmatprep.subr.bf16.mxu0 0
    %1499 = vmatpush1.bf16.msra.mxu0 0
    %1500 = vmatprep.subr.bf16.mxu0 0
    %1501 = vmatpush1.bf16.msra.mxu0 0
    %1502 = vmatprep.mubr.bf16.mxu0 0
    %1503 = vmatmul.mubr.bf16.gmra.mrb[0].mxu0 %v1423
    %v1504 = vpop.f32.mrb[0].mxu0
    %v1505 = vadd.f32 %v1464, %v1504
    %v1506 = vpop.f32.mrb[0].mxu0
    %v1507 = vpop.f32.mrb[0].mxu0
    %v1508 = vadd.f32 %v1467, %v1507
    %v1509 = vpop.f32.mrb[0].mxu0
    %1510 = vdwg.mxu0
    %1513 = vrot.lane.b32.xlu0 %v1505, 64
    %v1514 = vpop.permute.xlu0 %1513
    %1515 = vrot.lane.b32.xlu0 %v1508, 64
    %v1516 = vpop.permute.xlu0 %1515
    %v1519 = vmax.f32 %v1505, %v1514
    %v1520 = vmax.f32 %v1508, %v1516
    %v1521 = vmax.f32 %v1519, %v1520
    %v1523 = vlaneseq
    %v1524 = vshrl.u32 %v1523, 7
    %v1525 = vsub.s32 0, %v1524
    %v1526 = vrot.slane %v144, %v1525
    %v1528 = vadd.f32 %v1521, %v1526
    %v1529 = vmax.f32 %v1528, 0.0
    %1530 = vrot.lane.b32.xlu0 %v572, 72
    %v1531 = vpop.permute.xlu0 %1530
    %1533 = vrot.lane.b32.xlu0 %v666, 16
    %v1534 = vpop.permute.xlu0 %1533
    %1536 = vrot.lane.b32.xlu0 %v745, 88
    %v1537 = vpop.permute.xlu0 %1536
    %1540 = vrot.lane.b32.xlu0 %v819, 32
    %v1541 = vpop.permute.xlu0 %1540
    %v1543 = vsel %vm1258, %v493, %v1531
    %v1544 = vsel %vm1260, %v1531, %v1534
    %v1545 = vsel %vm1262, %v1544, %v1537
    %v1546 = vsel %vm1264, %v1537, %v1541
    %1547 = vrot.lane.b32.xlu0 %v666, 72
    %v1548 = vpop.permute.xlu0 %1547
    %1550 = vrot.lane.b32.xlu0 %v745, 16
    %v1551 = vpop.permute.xlu0 %1550
    %1553 = vrot.lane.b32.xlu0 %v819, 88
    %v1554 = vpop.permute.xlu0 %1553
    %1557 = vrot.lane.b32.xlu0 %v908, 32
    %v1558 = vpop.permute.xlu0 %1557
    %v1560 = vsel %vm1258, %v572, %v1548
    %v1561 = vsel %vm1260, %v1548, %v1551
    %v1562 = vsel %vm1262, %v1561, %v1554
    %v1563 = vsel %vm1264, %v1554, %v1558
    %v1564 = vpack.c.bf16 %v1560, %v1543
    %v1565 = vpack.c.bf16 %v1562, %v1545
    %v1566 = vpack.c.bf16 %v1563, %v1546
    %v1568 = vsel %vm1421, %v1566, 0
    %1570 = vmatprep.subr.bf16.mxu0 0
    %1571 = vmatpush1.bf16.msra.mxu0 %v1376
    %1572 = vmatprep.subr.bf16.mxu0 0
    %1573 = vmatpush1.bf16.msra.mxu0 %v1377
    %1574 = vmatprep.subr.bf16.mxu0 0
    %1575 = vmatpush1.bf16.msra.mxu0 %v1378
    %1576 = vmatprep.subr.bf16.mxu0 0
    %1577 = vmatpush1.bf16.msra.mxu0 %v1379
    %1578 = vmatprep.subr.bf16.mxu0 0
    %1579 = vmatpush1.bf16.msra.mxu0 %v1380
    %1580 = vmatprep.subr.bf16.mxu0 0
    %1581 = vmatpush1.bf16.msra.mxu0 %v1381
    %1582 = vmatprep.subr.bf16.mxu0 0
    %1583 = vmatpush1.bf16.msra.mxu0 %v1382
    %1584 = vmatprep.subr.bf16.mxu0 0
    %1585 = vmatpush1.bf16.msra.mxu0 %v1383
    %1586 = vmatprep.subr.bf16.mxu0 0
    %1587 = vmatpush1.bf16.msra.mxu0 %v1384
    %1588 = vmatprep.subr.bf16.mxu0 0
    %1589 = vmatpush1.bf16.msra.mxu0 %v1385
    %1590 = vmatprep.subr.bf16.mxu0 0
    %1591 = vmatpush1.bf16.msra.mxu0 %v1386
    %1592 = vmatprep.subr.bf16.mxu0 0
    %1593 = vmatpush1.bf16.msra.mxu0 %v1387
    %1594 = vmatprep.subr.bf16.mxu0 0
    %1595 = vmatpush1.bf16.msra.mxu0 %v1388
    %1596 = vmatprep.subr.bf16.mxu0 0
    %1597 = vmatpush1.bf16.msra.mxu0 %v1389
    %1598 = vmatprep.subr.bf16.mxu0 0
    %1599 = vmatpush1.bf16.msra.mxu0 %v1390
    %1600 = vmatprep.subr.bf16.mxu0 0
    %1601 = vmatpush1.bf16.msra.mxu0 %v1391
    %1602 = vmatprep.mubr.bf16.mxu0 %v1565
    %1603 = vmatmul.mubr.bf16.gmra.mrb[0].mxu0 %v1564
    %v1604 = vpop.f32.mrb[0].mxu0
    %v1605 = vadd.f32 0.0, %v1604
    %v1606 = vpop.f32.mrb[0].mxu0
    %v1607 = vpop.f32.mrb[0].mxu0
    %v1608 = vadd.f32 0.0, %v1607
    %v1609 = vpop.f32.mrb[0].mxu0
    %1610 = vdwg.mxu0
    %1611 = vmatprep.subr.bf16.mxu0 0
    %1612 = vmatpush1.bf16.msra.mxu0 %v1392
    %1613 = vmatprep.subr.bf16.mxu0 0
    %1614 = vmatpush1.bf16.msra.mxu0 %v1393
    %1615 = vmatprep.subr.bf16.mxu0 0
    %1616 = vmatpush1.bf16.msra.mxu0 %v1394
    %1617 = vmatprep.subr.bf16.mxu0 0
    %1618 = vmatpush1.bf16.msra.mxu0 %v1395
    %1619 = vmatprep.subr.bf16.mxu0 0
    %1620 = vmatpush1.bf16.msra.mxu0 %v1396
    %1621 = vmatprep.subr.bf16.mxu0 0
    %1622 = vmatpush1.bf16.msra.mxu0 %v1397
    %1623 = vmatprep.subr.bf16.mxu0 0
    %1624 = vmatpush1.bf16.msra.mxu0 %v1427
    %1625 = vmatprep.subr.bf16.mxu0 0
    %1626 = vmatpush1.bf16.msra.mxu0 0
    %1627 = vmatprep.subr.bf16.mxu0 0
    %1628 = vmatpush1.bf16.msra.mxu0 0
    %1629 = vmatprep.subr.bf16.mxu0 0
    %1630 = vmatpush1.bf16.msra.mxu0 0
    %1631 = vmatprep.subr.bf16.mxu0 0
    %1632 = vmatpush1.bf16.msra.mxu0 0
    %1633 = vmatprep.subr.bf16.mxu0 0
    %1634 = vmatpush1.bf16.msra.mxu0 0
    %1635 = vmatprep.subr.bf16.mxu0 0
    %1636 = vmatpush1.bf16.msra.mxu0 0
    %1637 = vmatprep.subr.bf16.mxu0 0
    %1638 = vmatpush1.bf16.msra.mxu0 0
    %1639 = vmatprep.subr.bf16.mxu0 0
    %1640 = vmatpush1.bf16.msra.mxu0 0
    %1641 = vmatprep.subr.bf16.mxu0 0
    %1642 = vmatpush1.bf16.msra.mxu0 0
    %1643 = vmatprep.mubr.bf16.mxu0 0
    %1644 = vmatmul.mubr.bf16.gmra.mrb[0].mxu0 %v1568
    %v1645 = vpop.f32.mrb[0].mxu0
    %v1646 = vadd.f32 %v1605, %v1645
    %v1647 = vpop.f32.mrb[0].mxu0
    %v1648 = vpop.f32.mrb[0].mxu0
    %v1649 = vadd.f32 %v1608, %v1648
    %v1650 = vpop.f32.mrb[0].mxu0
    %1651 = vdwg.mxu0
    %1654 = vrot.lane.b32.xlu0 %v1646, 64
    %v1655 = vpop.permute.xlu0 %1654
    %1656 = vrot.lane.b32.xlu0 %v1649, 64
    %v1657 = vpop.permute.xlu0 %1656
    %v1660 = vmax.f32 %v1646, %v1655
    %v1661 = vmax.f32 %v1649, %v1657
    %v1662 = vmax.f32 %v1660, %v1661
    %v1663 = vadd.f32 %v1662, %v1526
    %v1664 = vmax.f32 %v1663, 0.0
    %1665 = vrot.lane.b32.xlu0 %v745, 72
    %v1666 = vpop.permute.xlu0 %1665
    %1668 = vrot.lane.b32.xlu0 %v819, 16
    %v1669 = vpop.permute.xlu0 %1668
    %1671 = vrot.lane.b32.xlu0 %v908, 88
    %v1672 = vpop.permute.xlu0 %1671
    %1675 = vrot.lane.b32.xlu0 %v982, 32
    %v1676 = vpop.permute.xlu0 %1675
    %v1678 = vsel %vm1258, %v666, %v1666
    %v1679 = vsel %vm1260, %v1666, %v1669
    %v1680 = vsel %vm1262, %v1679, %v1672
    %v1681 = vsel %vm1264, %v1672, %v1676
    %1682 = vrot.lane.b32.xlu0 %v819, 72
    %v1683 = vpop.permute.xlu0 %1682
    %1685 = vrot.lane.b32.xlu0 %v908, 16
    %v1686 = vpop.permute.xlu0 %1685
    %1688 = vrot.lane.b32.xlu0 %v982, 88
    %v1689 = vpop.permute.xlu0 %1688
    %1692 = vrot.lane.b32.xlu0 %v1078, 32
    %v1693 = vpop.permute.xlu0 %1692
    %v1695 = vsel %vm1258, %v745, %v1683
    %v1696 = vsel %vm1260, %v1683, %v1686
    %v1697 = vsel %vm1262, %v1696, %v1689
    %v1698 = vsel %vm1264, %v1689, %v1693
    %v1699 = vpack.c.bf16 %v1695, %v1678
    %v1700 = vpack.c.bf16 %v1697, %v1680
    %v1701 = vpack.c.bf16 %v1698, %v1681
    %v1703 = vsel %vm1421, %v1701, 0
    %1705 = vmatprep.subr.bf16.mxu0 0
    %1706 = vmatpush1.bf16.msra.mxu0 %v1376
    %1707 = vmatprep.subr.bf16.mxu0 0
    %1708 = vmatpush1.bf16.msra.mxu0 %v1377
    %1709 = vmatprep.subr.bf16.mxu0 0
    %1710 = vmatpush1.bf16.msra.mxu0 %v1378
    %1711 = vmatprep.subr.bf16.mxu0 0
    %1712 = vmatpush1.bf16.msra.mxu0 %v1379
    %1713 = vmatprep.subr.bf16.mxu0 0
    %1714 = vmatpush1.bf16.msra.mxu0 %v1380
    %1715 = vmatprep.subr.bf16.mxu0 0
    %1716 = vmatpush1.bf16.msra.mxu0 %v1381
    %1717 = vmatprep.subr.bf16.mxu0 0
    %1718 = vmatpush1.bf16.msra.mxu0 %v1382
    %1719 = vmatprep.subr.bf16.mxu0 0
    %1720 = vmatpush1.bf16.msra.mxu0 %v1383
    %1721 = vmatprep.subr.bf16.mxu0 0
    %1722 = vmatpush1.bf16.msra.mxu0 %v1384
    %1723 = vmatprep.subr.bf16.mxu0 0
    %1724 = vmatpush1.bf16.msra.mxu0 %v1385
    %1725 = vmatprep.subr.bf16.mxu0 0
    %1726 = vmatpush1.bf16.msra.mxu0 %v1386
    %1727 = vmatprep.subr.bf16.mxu0 0
    %1728 = vmatpush1.bf16.msra.mxu0 %v1387
    %1729 = vmatprep.subr.bf16.mxu0 0
    %1730 = vmatpush1.bf16.msra.mxu0 %v1388
    %1731 = vmatprep.subr.bf16.mxu0 0
    %1732 = vmatpush1.bf16.msra.mxu0 %v1389
    %1733 = vmatprep.subr.bf16.mxu0 0
    %1734 = vmatpush1.bf16.msra.mxu0 %v1390
    %1735 = vmatprep.subr.bf16.mxu0 0
    %1736 = vmatpush1.bf16.msra.mxu0 %v1391
    %1737 = vmatprep.mubr.bf16.mxu0 %v1700
    %1738 = vmatmul.mubr.bf16.gmra.mrb[0].mxu0 %v1699
    %v1739 = vpop.f32.mrb[0].mxu0
    %v1740 = vadd.f32 0.0, %v1739
    %v1741 = vpop.f32.mrb[0].mxu0
    %v1742 = vpop.f32.mrb[0].mxu0
    %v1743 = vadd.f32 0.0, %v1742
    %v1744 = vpop.f32.mrb[0].mxu0
    %1745 = vdwg.mxu0
    %1746 = vmatprep.subr.bf16.mxu0 0
    %1747 = vmatpush1.bf16.msra.mxu0 %v1392
    %1748 = vmatprep.subr.bf16.mxu0 0
    %1749 = vmatpush1.bf16.msra.mxu0 %v1393
    %1750 = vmatprep.subr.bf16.mxu0 0
    %1751 = vmatpush1.bf16.msra.mxu0 %v1394
    %1752 = vmatprep.subr.bf16.mxu0 0
    %1753 = vmatpush1.bf16.msra.mxu0 %v1395
    %1754 = vmatprep.subr.bf16.mxu0 0
    %1755 = vmatpush1.bf16.msra.mxu0 %v1396
    %1756 = vmatprep.subr.bf16.mxu0 0
    %1757 = vmatpush1.bf16.msra.mxu0 %v1397
    %1758 = vmatprep.subr.bf16.mxu0 0
    %1759 = vmatpush1.bf16.msra.mxu0 %v1427
    %1760 = vmatprep.subr.bf16.mxu0 0
    %1761 = vmatpush1.bf16.msra.mxu0 0
    %1762 = vmatprep.subr.bf16.mxu0 0
    %1763 = vmatpush1.bf16.msra.mxu0 0
    %1764 = vmatprep.subr.bf16.mxu0 0
    %1765 = vmatpush1.bf16.msra.mxu0 0
    %1766 = vmatprep.subr.bf16.mxu0 0
    %1767 = vmatpush1.bf16.msra.mxu0 0
    %1768 = vmatprep.subr.bf16.mxu0 0
    %1769 = vmatpush1.bf16.msra.mxu0 0
    %1770 = vmatprep.subr.bf16.mxu0 0
    %1771 = vmatpush1.bf16.msra.mxu0 0
    %1772 = vmatprep.subr.bf16.mxu0 0
    %1773 = vmatpush1.bf16.msra.mxu0 0
    %1774 = vmatprep.subr.bf16.mxu0 0
    %1775 = vmatpush1.bf16.msra.mxu0 0
    %1776 = vmatprep.subr.bf16.mxu0 0
    %1777 = vmatpush1.bf16.msra.mxu0 0
    %1778 = vmatprep.mubr.bf16.mxu0 0
    %1779 = vmatmul.mubr.bf16.gmra.mrb[0].mxu0 %v1703
    %v1780 = vpop.f32.mrb[0].mxu0
    %v1781 = vadd.f32 %v1740, %v1780
    %v1782 = vpop.f32.mrb[0].mxu0
    %v1783 = vpop.f32.mrb[0].mxu0
    %v1784 = vadd.f32 %v1743, %v1783
    %v1785 = vpop.f32.mrb[0].mxu0
    %1786 = vdwg.mxu0
    %1789 = vrot.lane.b32.xlu0 %v1781, 64
    %v1790 = vpop.permute.xlu0 %1789
    %1791 = vrot.lane.b32.xlu0 %v1784, 64
    %v1792 = vpop.permute.xlu0 %1791
    %v1795 = vmax.f32 %v1781, %v1790
    %v1796 = vmax.f32 %v1784, %v1792
    %v1797 = vmax.f32 %v1795, %v1796
    %v1798 = vadd.f32 %v1797, %v1526
    %v1799 = vmax.f32 %v1798, 0.0
    %1800 = vrot.lane.b32.xlu0 %v908, 72
    %v1801 = vpop.permute.xlu0 %1800
    %1803 = vrot.lane.b32.xlu0 %v982, 16
    %v1804 = vpop.permute.xlu0 %1803
    %1806 = vrot.lane.b32.xlu0 %v1078, 88
    %v1807 = vpop.permute.xlu0 %1806
    %1810 = vrot.lane.b32.xlu0 %v1152, 32
    %v1811 = vpop.permute.xlu0 %1810
    %v1813 = vsel %vm1258, %v819, %v1801
    %v1814 = vsel %vm1260, %v1801, %v1804
    %v1815 = vsel %vm1262, %v1814, %v1807
    %v1816 = vsel %vm1264, %v1807, %v1811
    %1817 = vrot.lane.b32.xlu0 %v982, 72
    %v1818 = vpop.permute.xlu0 %1817
    %1820 = vrot.lane.b32.xlu0 %v1078, 16
    %v1821 = vpop.permute.xlu0 %1820
    %1823 = vrot.lane.b32.xlu0 %v1152, 88
    %v1824 = vpop.permute.xlu0 %1823
    %1827 = vrot.lane.b32.xlu0 %v1241, 32
    %v1828 = vpop.permute.xlu0 %1827
    %v1830 = vsel %vm1258, %v908, %v1818
    %v1831 = vsel %vm1260, %v1818, %v1821
    %v1832 = vsel %vm1262, %v1831, %v1824
    %v1833 = vsel %vm1264, %v1824, %v1828
    %v1834 = vpack.c.bf16 %v1830, %v1813
    %v1835 = vpack.c.bf16 %v1832, %v1815
    %v1836 = vpack.c.bf16 %v1833, %v1816
    %v1838 = vsel %vm1421, %v1836, 0
    %1840 = vmatprep.subr.bf16.mxu0 0
    %1841 = vmatpush1.bf16.msra.mxu0 %v1376
    %1842 = vmatprep.subr.bf16.mxu0 0
    %1843 = vmatpush1.bf16.msra.mxu0 %v1377
    %1844 = vmatprep.subr.bf16.mxu0 0
    %1845 = vmatpush1.bf16.msra.mxu0 %v1378
    %1846 = vmatprep.subr.bf16.mxu0 0
    %1847 = vmatpush1.bf16.msra.mxu0 %v1379
    %1848 = vmatprep.subr.bf16.mxu0 0
    %1849 = vmatpush1.bf16.msra.mxu0 %v1380
    %1850 = vmatprep.subr.bf16.mxu0 0
    %1851 = vmatpush1.bf16.msra.mxu0 %v1381
    %1852 = vmatprep.subr.bf16.mxu0 0
    %1853 = vmatpush1.bf16.msra.mxu0 %v1382
    %1854 = vmatprep.subr.bf16.mxu0 0
    %1855 = vmatpush1.bf16.msra.mxu0 %v1383
    %1856 = vmatprep.subr.bf16.mxu0 0
    %1857 = vmatpush1.bf16.msra.mxu0 %v1384
    %1858 = vmatprep.subr.bf16.mxu0 0
    %1859 = vmatpush1.bf16.msra.mxu0 %v1385
    %1860 = vmatprep.subr.bf16.mxu0 0
    %1861 = vmatpush1.bf16.msra.mxu0 %v1386
    %1862 = vmatprep.subr.bf16.mxu0 0
    %1863 = vmatpush1.bf16.msra.mxu0 %v1387
    %1864 = vmatprep.subr.bf16.mxu0 0
    %1865 = vmatpush1.bf16.msra.mxu0 %v1388
    %1866 = vmatprep.subr.bf16.mxu0 0
    %1867 = vmatpush1.bf16.msra.mxu0 %v1389
    %1868 = vmatprep.subr.bf16.mxu0 0
    %1869 = vmatpush1.bf16.msra.mxu0 %v1390
    %1870 = vmatprep.subr.bf16.mxu0 0
    %1871 = vmatpush1.bf16.msra.mxu0 %v1391
    %1872 = vmatprep.mubr.bf16.mxu0 %v1835
    %1873 = vmatmul.mubr.bf16.gmra.mrb[0].mxu0 %v1834
    %v1874 = vpop.f32.mrb[0].mxu0
    %v1875 = vadd.f32 0.0, %v1874
    %v1876 = vpop.f32.mrb[0].mxu0
    %v1877 = vpop.f32.mrb[0].mxu0
    %v1878 = vadd.f32 0.0, %v1877
    %v1879 = vpop.f32.mrb[0].mxu0
    %1880 = vdwg.mxu0
    %1881 = vmatprep.subr.bf16.mxu0 0
    %1882 = vmatpush1.bf16.msra.mxu0 %v1392
    %1883 = vmatprep.subr.bf16.mxu0 0
    %1884 = vmatpush1.bf16.msra.mxu0 %v1393
    %1885 = vmatprep.subr.bf16.mxu0 0
    %1886 = vmatpush1.bf16.msra.mxu0 %v1394
    %1887 = vmatprep.subr.bf16.mxu0 0
    %1888 = vmatpush1.bf16.msra.mxu0 %v1395
    %1889 = vmatprep.subr.bf16.mxu0 0
    %1890 = vmatpush1.bf16.msra.mxu0 %v1396
    %1891 = vmatprep.subr.bf16.mxu0 0
    %1892 = vmatpush1.bf16.msra.mxu0 %v1397
    %1893 = vmatprep.subr.bf16.mxu0 0
    %1894 = vmatpush1.bf16.msra.mxu0 %v1427
    %1895 = vmatprep.subr.bf16.mxu0 0
    %1896 = vmatpush1.bf16.msra.mxu0 0
    %1897 = vmatprep.subr.bf16.mxu0 0
    %1898 = vmatpush1.bf16.msra.mxu0 0
    %1899 = vmatprep.subr.bf16.mxu0 0
    %1900 = vmatpush1.bf16.msra.mxu0 0
    %1901 = vmatprep.subr.bf16.mxu0 0
    %1902 = vmatpush1.bf16.msra.mxu0 0
    %1903 = vmatprep.subr.bf16.mxu0 0
    %1904 = vmatpush1.bf16.msra.mxu0 0
    %1905 = vmatprep.subr.bf16.mxu0 0
    %1906 = vmatpush1.bf16.msra.mxu0 0
    %1907 = vmatprep.subr.bf16.mxu0 0
    %1908 = vmatpush1.bf16.msra.mxu0 0
    %1909 = vmatprep.subr.bf16.mxu0 0
    %1910 = vmatpush1.bf16.msra.mxu0 0
    %1911 = vmatprep.subr.bf16.mxu0 0
    %1912 = vmatpush1.bf16.msra.mxu0 0
    %1913 = vmatprep.mubr.bf16.mxu0 0
    %1914 = vmatmul.mubr.bf16.gmra.mrb[0].mxu0 %v1838
    %v1915 = vpop.f32.mrb[0].mxu0
    %v1916 = vadd.f32 %v1875, %v1915
    %v1917 = vpop.f32.mrb[0].mxu0
    %v1918 = vpop.f32.mrb[0].mxu0
    %v1919 = vadd.f32 %v1878, %v1918
    %v1920 = vpop.f32.mrb[0].mxu0
    %1921 = vdwg.mxu0
    %1924 = vrot.lane.b32.xlu0 %v1916, 64
    %v1925 = vpop.permute.xlu0 %1924
    %1926 = vrot.lane.b32.xlu0 %v1919, 64
    %v1927 = vpop.permute.xlu0 %1926
    %v1930 = vmax.f32 %v1916, %v1925
    %v1931 = vmax.f32 %v1919, %v1927
    %v1932 = vmax.f32 %v1930, %v1931
    %v1933 = vadd.f32 %v1932, %v1526
    %v1934 = vmax.f32 %v1933, 0.0
    %1936 = vrot.lane.b32.xlu0 %v1664, 64
    %v1937 = vpop.permute.xlu0 %1936
    %1940 = vrot.lane.b32.xlu0 %v1934, 64
    %v1941 = vpop.permute.xlu0 %1940
    %vm1943 = vcmask 523264
    %v1944 = vsel %vm1943, %v1529, %v1937
    %v1945 = vsel %vm1943, %v1799, %v1941
    %v1946 = vpack.c.bf16 %v1944, %v1944
    %v1947 = vpack.c.bf16 %v1945, %v1945
    %v1948 = vld [vmem:[#allocation4] sm:$0xf]
    %v1949 = vld [vmem:[#allocation4 + $0x4] sm:$0xf]
    %v1950 = vld [vmem:[#allocation4 + $0x8] sm:$0xf]
    %v1951 = vld [vmem:[#allocation4 + $0xc] sm:$0xf]
    %v1952 = vld [vmem:[#allocation4 + $0x10] sm:$0xf]
    %v1953 = vld [vmem:[#allocation4 + $0x14] sm:$0xf]
    %v1954 = vld [vmem:[#allocation4 + $0x18] sm:$0xf]
    %v1955 = vld [vmem:[#allocation4 + $0x1c] sm:$0xf]
    %v1956 = vld [vmem:[#allocation4 + $0x20] sm:$0xf]
    %v1957 = vld [vmem:[#allocation4 + $0x24] sm:$0xf]
    %v1958 = vld [vmem:[#allocation4 + $0x28] sm:$0xf]
    %v1959 = vld [vmem:[#allocation4 + $0x2c] sm:$0xf]
    %v1960 = vld [vmem:[#allocation4 + $0x30] sm:$0xf]
    %v1961 = vld [vmem:[#allocation4 + $0x34] sm:$0xf]
    %v1962 = vld [vmem:[#allocation4 + $0x38] sm:$0xf]
    %v1963 = vld [vmem:[#allocation4 + $0x3c] sm:$0xf]
    %v1964 = vld [vmem:[#allocation4 + $0x40] sm:$0xf]
    %v1965 = vld [vmem:[#allocation4 + $0x44] sm:$0xf]
    %v1966 = vld [vmem:[#allocation4 + $0x48] sm:$0xf]
    %v1967 = vld [vmem:[#allocation4 + $0x4c] sm:$0xf]
    %v1968 = vld [vmem:[#allocation4 + $0x50] sm:$0xf]
    %v1969 = vld [vmem:[#allocation4 + $0x54] sm:$0xf]
    %v1970 = vld [vmem:[#allocation4 + $0x58] sm:$0xf]
    %v1971 = vld [vmem:[#allocation4 + $0x5c] sm:$0xf]
    %v1972 = vld [vmem:[#allocation4 + $0x60] sm:$0xf]
    %v1973 = vld [vmem:[#allocation4 + $0x64] sm:$0xf]
    %v1974 = vld [vmem:[#allocation4 + $0x68] sm:$0xf]
    %v1975 = vld [vmem:[#allocation4 + $0x6c] sm:$0xf]
    %v1976 = vld [vmem:[#allocation4 + $0x70] sm:$0xf]
    %v1977 = vld [vmem:[#allocation4 + $0x74] sm:$0xf]
    %v1978 = vld [vmem:[#allocation4 + $0x78] sm:$0xf]
    %v1979 = vld [vmem:[#allocation4 + $0x7c] sm:$0xf]
    %v1980 = vld [vmem:[%s6] sm:$0x1]
    %v1982 = vlaneseq
    %v1983 = vshrl.u32 %v1982, 7
    %v1984 = vsub.s32 0, %v1983
    %v1985 = vrot.slane %v1980, %v1984
    %v2019 = vunpack.c.l.b16 %v1948
    %v2020 = vunpack.c.l.b16 %v1949
    %v2021 = vunpack.c.l.b16 %v1950
    %v2022 = vunpack.c.l.b16 %v1951
    %v2023 = vunpack.c.l.b16 %v1952
    %v2024 = vunpack.c.l.b16 %v1953
    %v2025 = vunpack.c.l.b16 %v1954
    %v2026 = vunpack.c.l.b16 %v1955
    %v2027 = vunpack.c.l.b16 %v1956
    %v2028 = vunpack.c.l.b16 %v1957
    %v2029 = vunpack.c.l.b16 %v1958
    %v2030 = vunpack.c.l.b16 %v1959
    %v2031 = vunpack.c.l.b16 %v1960
    %v2032 = vunpack.c.l.b16 %v1961
    %v2033 = vunpack.c.l.b16 %v1962
    %v2034 = vunpack.c.l.b16 %v1963
    %v2035 = vunpack.c.l.b16 %v1964
    %v2036 = vunpack.c.l.b16 %v1965
    %v2037 = vunpack.c.l.b16 %v1966
    %v2038 = vunpack.c.l.b16 %v1967
    %v2039 = vunpack.c.l.b16 %v1968
    %v2040 = vunpack.c.l.b16 %v1969
    %v2041 = vunpack.c.l.b16 %v1970
    %v2042 = vunpack.c.l.b16 %v1971
    %v2043 = vunpack.c.l.b16 %v1972
    %v2044 = vunpack.c.l.b16 %v1973
    %v2045 = vunpack.c.l.b16 %v1974
    %v2046 = vunpack.c.l.b16 %v1975
    %v2047 = vunpack.c.l.b16 %v1976
    %v2048 = vunpack.c.l.b16 %v1977
    %v2049 = vunpack.c.l.b16 %v1978
    %v2050 = vunpack.c.l.b16 %v1979
    %v2051 = vpack.c.b16 %v2020, %v2019
    %v2052 = vpack.c.b16 %v2022, %v2021
    %v2053 = vpack.c.b16 %v2024, %v2023
    %v2054 = vpack.c.b16 %v2026, %v2025
    %v2055 = vpack.c.b16 %v2028, %v2027
    %v2056 = vpack.c.b16 %v2030, %v2029
    %v2057 = vpack.c.b16 %v2032, %v2031
    %v2058 = vpack.c.b16 %v2034, %v2033
    %v2059 = vpack.c.b16 %v2036, %v2035
    %v2060 = vpack.c.b16 %v2038, %v2037
    %v2061 = vpack.c.b16 %v2040, %v2039
    %v2062 = vpack.c.b16 %v2042, %v2041
    %v2063 = vpack.c.b16 %v2044, %v2043
    %v2064 = vpack.c.b16 %v2046, %v2045
    %v2065 = vpack.c.b16 %v2048, %v2047
    %v2066 = vpack.c.b16 %v2050, %v2049
    %2083 = vmatprep.subr.bf16.mxu0 0
    %2084 = vmatpush1.bf16.msra.mxu0 %v2051
    %2085 = vmatprep.subr.bf16.mxu0 0
    %2086 = vmatpush1.bf16.msra.mxu0 %v2052
    %2087 = vmatprep.subr.bf16.mxu0 0
    %2088 = vmatpush1.bf16.msra.mxu0 %v2053
    %2089 = vmatprep.subr.bf16.mxu0 0
    %2090 = vmatpush1.bf16.msra.mxu0 %v2054
    %2091 = vmatprep.subr.bf16.mxu0 0
    %2092 = vmatpush1.bf16.msra.mxu0 %v2055
    %2093 = vmatprep.subr.bf16.mxu0 0
    %2094 = vmatpush1.bf16.msra.mxu0 %v2056
    %2095 = vmatprep.subr.bf16.mxu0 0
    %2096 = vmatpush1.bf16.msra.mxu0 %v2057
    %2097 = vmatprep.subr.bf16.mxu0 0
    %2098 = vmatpush1.bf16.msra.mxu0 %v2058
    %2099 = vmatprep.subr.bf16.mxu0 0
    %2100 = vmatpush1.bf16.msra.mxu0 %v2059
    %2101 = vmatprep.subr.bf16.mxu0 0
    %2102 = vmatpush1.bf16.msra.mxu0 %v2060
    %2103 = vmatprep.subr.bf16.mxu0 0
    %2104 = vmatpush1.bf16.msra.mxu0 %v2061
    %2105 = vmatprep.subr.bf16.mxu0 0
    %2106 = vmatpush1.bf16.msra.mxu0 %v2062
    %2107 = vmatprep.subr.bf16.mxu0 0
    %2108 = vmatpush1.bf16.msra.mxu0 %v2063
    %2109 = vmatprep.subr.bf16.mxu0 0
    %2110 = vmatpush1.bf16.msra.mxu0 %v2064
    %2111 = vmatprep.subr.bf16.mxu0 0
    %2112 = vmatpush1.bf16.msra.mxu0 %v2065
    %2113 = vmatprep.subr.bf16.mxu0 0
    %2114 = vmatpush1.bf16.msra.mxu0 %v2066
    %2115 = vmatprep.mubr.bf16.mxu0 %v1947
    %2116 = vmatmul.mubr.bf16.gmra.mrb[0].mxu0 %v1946
    %v2117 = vpop.f32.mrb[0].mxu0
    %v2118 = vadd.f32 %v1985, %v2117
    %v2119 = vpop.f32.mrb[0].mxu0
    %v2120 = vpop.f32.mrb[0].mxu0
    %v2121 = vpop.f32.mrb[0].mxu0
    %2122 = vdwg.mxu0
    %v2123 = vmax.f32 %v2118, 0.0
    %v2124 = vpack.c.bf16 %v2123, %v2123
    %v2125 = vld [vmem:[%s7] sm:$0xf]
    %v2126 = vld [vmem:[%s7 + $0x4] sm:$0xf]
    %v2127 = vld [vmem:[%s7 + $0x8] sm:$0xf]
    %v2128 = vld [vmem:[%s7 + $0xc] sm:$0xf]
    %v2129 = vld [vmem:[%s7 + $0x10] sm:$0xf]
    %v2130 = vld [vmem:[%s7 + $0x14] sm:$0xf]
    %v2131 = vld [vmem:[%s7 + $0x18] sm:$0xf]
    %v2132 = vld [vmem:[%s7 + $0x1c] sm:$0xf]
    %v2133 = vld [vmem:[%s7 + $0x20] sm:$0xf]
    %v2134 = vld [vmem:[%s7 + $0x24] sm:$0xf]
    %v2135 = vld [vmem:[%s7 + $0x28] sm:$0xf]
    %v2136 = vld [vmem:[%s7 + $0x2c] sm:$0xf]
    %v2137 = vld [vmem:[%s7 + $0x30] sm:$0xf]
    %v2138 = vld [vmem:[%s7 + $0x34] sm:$0xf]
    %v2139 = vld [vmem:[%s7 + $0x38] sm:$0xf]
    %v2140 = vld [vmem:[%s7 + $0x3c] sm:$0xf]
    %v2141 = vld [vmem:[%s8] sm:$0x1]
    %v2143 = vlaneseq
    %v2144 = vshrl.u32 %v2143, 7
    %v2145 = vsub.s32 0, %v2144
    %v2146 = vrot.slane %v2141, %v2145
    %v2164 = vunpack.c.l.b16 %v2125
    %v2165 = vunpack.c.l.b16 %v2126
    %v2166 = vunpack.c.l.b16 %v2127
    %v2167 = vunpack.c.l.b16 %v2128
    %v2168 = vunpack.c.l.b16 %v2129
    %v2169 = vunpack.c.l.b16 %v2130
    %v2170 = vunpack.c.l.b16 %v2131
    %v2171 = vunpack.c.l.b16 %v2132
    %v2172 = vunpack.c.l.b16 %v2133
    %v2173 = vunpack.c.l.b16 %v2134
    %v2174 = vunpack.c.l.b16 %v2135
    %v2175 = vunpack.c.l.b16 %v2136
    %v2176 = vunpack.c.l.b16 %v2137
    %v2177 = vunpack.c.l.b16 %v2138
    %v2178 = vunpack.c.l.b16 %v2139
    %v2179 = vunpack.c.l.b16 %v2140
    %v2180 = vpack.c.b16 %v2165, %v2164
    %v2181 = vpack.c.b16 %v2167, %v2166
    %v2182 = vpack.c.b16 %v2169, %v2168
    %v2183 = vpack.c.b16 %v2171, %v2170
    %v2184 = vpack.c.b16 %v2173, %v2172
    %v2185 = vpack.c.b16 %v2175, %v2174
    %v2186 = vpack.c.b16 %v2177, %v2176
    %v2187 = vpack.c.b16 %v2179, %v2178
    %2196 = vmatprep.subr.bf16.mxu0 0
    %2197 = vmatpush1.bf16.msra.mxu0 %v2180
    %2198 = vmatprep.subr.bf16.mxu0 0
    %2199 = vmatpush1.bf16.msra.mxu0 %v2181
    %2200 = vmatprep.subr.bf16.mxu0 0
    %2201 = vmatpush1.bf16.msra.mxu0 %v2182
    %2202 = vmatprep.subr.bf16.mxu0 0
    %2203 = vmatpush1.bf16.msra.mxu0 %v2183
    %2204 = vmatprep.subr.bf16.mxu0 0
    %2205 = vmatpush1.bf16.msra.mxu0 %v2184
    %2206 = vmatprep.subr.bf16.mxu0 0
    %2207 = vmatpush1.bf16.msra.mxu0 %v2185
    %2208 = vmatprep.subr.bf16.mxu0 0
    %2209 = vmatpush1.bf16.msra.mxu0 %v2186
    %2210 = vmatprep.subr.bf16.mxu0 0
    %2211 = vmatpush1.bf16.msra.mxu0 %v2187
    %2212 = vmatprep.subr.bf16.mxu0 0
    %2213 = vmatpush1.bf16.msra.mxu0 0
    %2214 = vmatprep.subr.bf16.mxu0 0
    %2215 = vmatpush1.bf16.msra.mxu0 0
    %2216 = vmatprep.subr.bf16.mxu0 0
    %2217 = vmatpush1.bf16.msra.mxu0 0
    %2218 = vmatprep.subr.bf16.mxu0 0
    %2219 = vmatpush1.bf16.msra.mxu0 0
    %2220 = vmatprep.subr.bf16.mxu0 0
    %2221 = vmatpush1.bf16.msra.mxu0 0
    %2222 = vmatprep.subr.bf16.mxu0 0
    %2223 = vmatpush1.bf16.msra.mxu0 0
    %2224 = vmatprep.subr.bf16.mxu0 0
    %2225 = vmatpush1.bf16.msra.mxu0 0
    %2226 = vmatprep.subr.bf16.mxu0 0
    %2227 = vmatpush1.bf16.msra.mxu0 0
    %2228 = vmatprep.mubr.bf16.mxu0 0
    %2229 = vmatmul.mubr.bf16.gmra.mrb[0].mxu0 %v2124
    %v2230 = vpop.f32.mrb[0].mxu0
    %v2231 = vadd.f32 %v2146, %v2230
    %v2232 = vpop.f32.mrb[0].mxu0
    %v2233 = vpop.f32.mrb[0].mxu0
    %v2234 = vpop.f32.mrb[0].mxu0
    %2235 = vdwg.mxu0
    %v2236 = vmax.f32 %v2231, 0.0
    %v2237 = vpack.c.bf16 %v2236, %v2236
    %v2238 = vld [vmem:[#allocation6] sm:$0xf]
    %v2239 = vld [vmem:[#allocation6 + $0x4] sm:$0xf]
    %v2240 = vld [vmem:[#allocation6 + $0x8] sm:$0xf]
    %v2241 = vld [vmem:[#allocation6 + $0xc] sm:$0xf]
    %v2242 = vld [vmem:[#allocation6 + $0x10] sm:$0xf]
    %v2243 = vld [vmem:[#allocation6 + $0x14] sm:$0xf]
    %v2244 = vld [vmem:[#allocation6 + $0x18] sm:$0xf]
    %v2245 = vld [vmem:[#allocation6 + $0x1c] sm:$0xf]
    %v2246 = vld [vmem:[#allocation6 + $0x20] sm:$0xf]
    %v2247 = vld [vmem:[#allocation6 + $0x24] sm:$0xf]
    %v2248 = vld [vmem:[#allocation6 + $0x28] sm:$0xf]
    %v2249 = vld [vmem:[#allocation6 + $0x2c] sm:$0xf]
    %v2250 = vld [vmem:[#allocation6 + $0x30] sm:$0xf]
    %v2251 = vld [vmem:[#allocation6 + $0x34] sm:$0xf]
    %v2252 = vld [vmem:[#allocation6 + $0x38] sm:$0xf]
    %v2253 = vld [vmem:[#allocation6 + $0x3c] sm:$0xf]
    %v2254 = vld [vmem:[%s10] sm:$0x1]
    %v2256 = vlaneseq
    %v2257 = vshrl.u32 %v2256, 7
    %v2258 = vsub.s32 0, %v2257
    %v2259 = vrot.slane %v2254, %v2258
    %v2277 = vunpack.c.l.b16 %v2238
    %v2278 = vunpack.c.l.b16 %v2239
    %v2279 = vunpack.c.l.b16 %v2240
    %v2280 = vunpack.c.l.b16 %v2241
    %v2281 = vunpack.c.l.b16 %v2242
    %v2282 = vunpack.c.l.b16 %v2243
    %v2283 = vunpack.c.l.b16 %v2244
    %v2284 = vunpack.c.l.b16 %v2245
    %v2285 = vunpack.c.l.b16 %v2246
    %v2286 = vunpack.c.l.b16 %v2247
    %v2287 = vunpack.c.l.b16 %v2248
    %v2288 = vunpack.c.l.b16 %v2249
    %v2289 = vunpack.c.l.b16 %v2250
    %v2290 = vunpack.c.l.b16 %v2251
    %v2291 = vunpack.c.l.b16 %v2252
    %v2292 = vunpack.c.l.b16 %v2253
    %v2293 = vpack.c.b16 %v2278, %v2277
    %v2294 = vpack.c.b16 %v2280, %v2279
    %v2295 = vpack.c.b16 %v2282, %v2281
    %v2296 = vpack.c.b16 %v2284, %v2283
    %v2297 = vpack.c.b16 %v2286, %v2285
    %v2298 = vpack.c.b16 %v2288, %v2287
    %v2299 = vpack.c.b16 %v2290, %v2289
    %v2300 = vpack.c.b16 %v2292, %v2291
    %2309 = vmatprep.subr.bf16.mxu0 0
    %2310 = vmatpush1.bf16.msra.mxu0 %v2293
    %2311 = vmatprep.subr.bf16.mxu0 0
    %2312 = vmatpush1.bf16.msra.mxu0 %v2294
    %2313 = vmatprep.subr.bf16.mxu0 0
    %2314 = vmatpush1.bf16.msra.mxu0 %v2295
    %2315 = vmatprep.subr.bf16.mxu0 0
    %2316 = vmatpush1.bf16.msra.mxu0 %v2296
    %2317 = vmatprep.subr.bf16.mxu0 0
    %2318 = vmatpush1.bf16.msra.mxu0 %v2297
    %2319 = vmatprep.subr.bf16.mxu0 0
    %2320 = vmatpush1.bf16.msra.mxu0 %v2298
    %2321 = vmatprep.subr.bf16.mxu0 0
    %2322 = vmatpush1.bf16.msra.mxu0 %v2299
    %2323 = vmatprep.subr.bf16.mxu0 0
    %2324 = vmatpush1.bf16.msra.mxu0 %v2300
    %2325 = vmatprep.subr.bf16.mxu0 0
    %2326 = vmatpush1.bf16.msra.mxu0 0
    %2327 = vmatprep.subr.bf16.mxu0 0
    %2328 = vmatpush1.bf16.msra.mxu0 0
    %2329 = vmatprep.subr.bf16.mxu0 0
    %2330 = vmatpush1.bf16.msra.mxu0 0
    %2331 = vmatprep.subr.bf16.mxu0 0
    %2332 = vmatpush1.bf16.msra.mxu0 0
    %2333 = vmatprep.subr.bf16.mxu0 0
    %2334 = vmatpush1.bf16.msra.mxu0 0
    %2335 = vmatprep.subr.bf16.mxu0 0
    %2336 = vmatpush1.bf16.msra.mxu0 0
    %2337 = vmatprep.subr.bf16.mxu0 0
    %2338 = vmatpush1.bf16.msra.mxu0 0
    %2339 = vmatprep.subr.bf16.mxu0 0
    %2340 = vmatpush1.bf16.msra.mxu0 0
    %2341 = vmatprep.mubr.bf16.mxu0 0
    %2342 = vmatmul.mubr.bf16.gmra.mrb[0].mxu0 %v2237
    %v2343 = vpop.f32.mrb[0].mxu0
    %v2344 = vadd.f32 %v2259, %v2343
    %v2345 = vpop.f32.mrb[0].mxu0
    %v2346 = vpop.f32.mrb[0].mxu0
    %v2347 = vpop.f32.mrb[0].mxu0
    %2348 = vdwg.mxu0
    %2349 = vst [vmem:[%s11] sm:$0xff] %v2344
    // Predicated region
    $region58: #{lenet_forward.1} parent=1 // pred_check
      _
    $region59: #{lenet_forward.1} parent=1 // pred_check_branch
      %2351 = sbr.rel (0) target = $region61
    $region60: #{lenet_forward.1} parent=1 // pred_region
      _
    $region61: #{lenet_forward.1} parent=1 // pred_fallthru
      _
    // Predicated region
    $region62: #{lenet_forward.1} parent=1 // pred_check
      _
    $region63: #{lenet_forward.1} parent=1 // pred_check_branch
      %2353 = sbr.rel (0) target = $region65
    $region64: #{lenet_forward.1} parent=1 // pred_region
      _
    $region65: #{lenet_forward.1} parent=1 // pred_fallthru
      _
    %2354 = vsyncpa [#allocation3], 1
    %2355 = vsyncpa [#allocation5], 1

</llo_original>
